<compile_context>
chip_gen: v6e
topology: v6e:2x2x1
jax: 0.10.0
libtpu: 0.0.40
codegen_flags: <defaults>
</compile_context>

<pallas_src>
import jax
import jax.numpy as jnp
from jax.experimental import pallas as pl
from jax.experimental.pallas import tpu as pltpu


def _dqn_lstm_kernel(x_ref, w_ih_ref, w_hh_ref, b_ref, w_fc_ref, b_fc_ref, out_ref):
    B, T, S = x_ref.shape
    Hp = w_hh_ref.shape[0]            # padded hidden size (multiple of 128)

    # Small loop-invariant values hoisted once (w_hh is re-read from VMEM per step on purpose:
    # holding its 32 vregs live across the unrolled loop would just create spill pressure).
    w_ih = w_ih_ref[...]                                   # (S, 4Hp) bf16
    bias = jnp.broadcast_to(b_ref[...], (B, 4 * Hp))       # (B, 4Hp) f32, hoisted broadcast

    h = jnp.zeros((B, Hp), jnp.float32)
    c = jnp.zeros((B, Hp), jnp.float32)

    # T is small & static: fully unrolled straight-line recurrence, h/c live in registers.
    for t in range(T):
        x_t = x_ref[:, t, :].astype(jnp.bfloat16)          # (B, S)
        gates = (
            jnp.dot(x_t, w_ih, preferred_element_type=jnp.float32)
            + jnp.dot(h.astype(jnp.bfloat16), w_hh_ref[...],
                      preferred_element_type=jnp.float32)
            + bias
        )                                                  # (B, 4Hp) f32

        # Lane-aligned whole-vreg gate slices (PyTorch gate order: i, f, g, o).
        i_g = jax.nn.sigmoid(gates[:, 0 * Hp:1 * Hp])
        f_g = jax.nn.sigmoid(gates[:, 1 * Hp:2 * Hp])
        g_g = jnp.tanh(gates[:, 2 * Hp:3 * Hp])
        o_g = jax.nn.sigmoid(gates[:, 3 * Hp:4 * Hp])

        c = f_g * c + i_g * g_g
        h = o_g * jnp.tanh(c)

    # Fused FC + LeakyReLU(0.01) on the last hidden state (once, off the recurrent path; f32).
    y = jnp.dot(h, w_fc_ref[...], preferred_element_type=jnp.float32) + b_fc_ref[...]
    out_ref[...] = jnp.where(y > 0.0, y, 0.01 * y).astype(out_ref.dtype)


def prepare_params(w_ih, w_hh, b_ih, b_hh, w_fc, b_fc):
    """One-time (parameter-load-time) prep: transpose, fuse biases, pad H to 128 lanes, bf16-cast
    the MXU weights. Call once and reuse; nothing here runs on the per-call forward path."""
    H = w_hh.shape[1]
    A = w_fc.shape[0]
    Hp = ((H + 127) // 128) * 128

    def pad_gate_cols(w_t):  # (in, 4H) -> (in, 4Hp), each gate block zero-padded to Hp lanes
        cols = []
        for k in range(4):
            g = w_t[:, k * H:(k + 1) * H]
            cols.append(jnp.pad(g, ((0, 0), (0, Hp - H))))
        return jnp.concatenate(cols, axis=1)

    w_ih_p = pad_gate_cols(jnp.transpose(w_ih).astype(jnp.float32)).astype(jnp.bfloat16)   # (S, 4Hp)
    w_hh_t = pad_gate_cols(jnp.transpose(w_hh).astype(jnp.float32))                        # (H, 4Hp)
    w_hh_p = jnp.pad(w_hh_t, ((0, Hp - H), (0, 0))).astype(jnp.bfloat16)                   # (Hp, 4Hp)
    b_p = pad_gate_cols((b_ih + b_hh).reshape(1, 4 * H).astype(jnp.float32))               # (1, 4Hp)
    w_fc_p = jnp.pad(jnp.transpose(w_fc).astype(jnp.float32), ((0, Hp - H), (0, 0)))       # (Hp, A)
    b_fc_p = b_fc.reshape(1, A).astype(jnp.float32)                                        # (1, A)
    return (w_ih_p, w_hh_p, b_p, w_fc_p, b_fc_p)


def dqn_lstm_forward(x_bts, params):
    """x_bts: [B, T, S] float32 (batch_first, like the PyTorch module). params: prepare_params()."""
    w_ih_p, w_hh_p, b_p, w_fc_p, b_fc_p = params
    B, T, S = x_bts.shape
    A = w_fc_p.shape[1]

    vmem = pl.BlockSpec(memory_space=pltpu.MemorySpace.VMEM)
    return pl.pallas_call(
        _dqn_lstm_kernel,
        out_shape=jax.ShapeDtypeStruct((B, A), jnp.float32),
        in_specs=[vmem] * 6,
        out_specs=vmem,
    )(x_bts.astype(jnp.float32), w_ih_p, w_hh_p, b_p, w_fc_p, b_fc_p)


def _reference_forward(x_bts, w_ih, w_hh, b_ih, b_hh, w_fc, b_fc):
    """Pure-JAX f32 reference mirroring torch.nn.LSTM + Linear + LeakyReLU."""
    B, T, S = x_bts.shape
    H = w_hh.shape[1]
    h = jnp.zeros((B, H), jnp.float32)
    c = jnp.zeros((B, H), jnp.float32)
    for t in range(T):
        x_t = x_bts[:, t, :]
        gates = x_t @ w_ih.T + b_ih + h @ w_hh.T + b_hh
        i_g = jax.nn.sigmoid(gates[:, 0 * H:1 * H])
        f_g = jax.nn.sigmoid(gates[:, 1 * H:2 * H])
        g_g = jnp.tanh(gates[:, 2 * H:3 * H])
        o_g = jax.nn.sigmoid(gates[:, 3 * H:4 * H])
        c = f_g * c + i_g * g_g
        h = o_g * jnp.tanh(c)
    y = h @ w_fc.T + b_fc
    return jnp.where(y > 0, y, 0.01 * y)


if __name__ == "__main__":
    B, T, S, H, A = 2, 8, 16, 32, 4   # batch, seq, state_size, hidden_size, action_size

    key = jax.random.PRNGKey(0)
    k = jax.random.split(key, 7)
    bound = 1.0 / jnp.sqrt(H)
    # Deterministic synthetic parameters (same shapes as nn.LSTM / nn.Linear).
    w_ih = jax.random.uniform(k[0], (4 * H, S), jnp.float32, -bound, bound)
    w_hh = jax.random.uniform(k[1], (4 * H, H), jnp.float32, -bound, bound)
    b_ih = jax.random.uniform(k[2], (4 * H,), jnp.float32, -bound, bound)
    b_hh = jax.random.uniform(k[3], (4 * H,), jnp.float32, -bound, bound)
    w_fc = jax.random.uniform(k[4], (A, H), jnp.float32, -bound, bound)
    b_fc = jax.random.uniform(k[5], (A,), jnp.float32, -bound, bound)
    x = jax.random.normal(k[6], (B, T, S), jnp.float32)

    # One-time parameter prep (off the per-call forward path).
    params = jax.tree_util.tree_map(jax.block_until_ready,
                                    prepare_params(w_ih, w_hh, b_ih, b_hh, w_fc, b_fc))

    fwd = jax.jit(dqn_lstm_forward)
    out = jax.block_until_ready(fwd(x, params))

    ref = _reference_forward(x, w_ih, w_hh, b_ih, b_hh, w_fc, b_fc)
    assert out.shape == (B, A)
    # bf16 MXU operands (f32 accumulation) -> relaxed tolerance vs the pure-f32 reference.
    assert jnp.allclose(out, ref, atol=2e-2, rtol=2e-2), "mismatch vs reference"
    print("KERNEL_OK")
</pallas_src>

<mosaic_0001>
module attributes {stable_mosaic.version = 11 : i64} {
  func.func @_dqn_lstm_kernel(%arg0: memref<2x8x16xf32, #tpu.memory_space<vmem>>, %arg1: memref<16x512xbf16, #tpu.memory_space<vmem>>, %arg2: memref<128x512xbf16, #tpu.memory_space<vmem>>, %arg3: memref<1x512xf32, #tpu.memory_space<vmem>>, %arg4: memref<128x4xf32, #tpu.memory_space<vmem>>, %arg5: memref<1x4xf32, #tpu.memory_space<vmem>>, %arg6: memref<2x4xf32, #tpu.memory_space<vmem>>) attributes {dimension_semantics = [], scalar_prefetch = 0 : i64, scratch_operands = 0 : i64, tpu.core_type = #tpu.core_type<tc>} {
    %c0 = arith.constant 0 : index
    %c0_0 = arith.constant 0 : index
    %0 = vector.load %arg1[%c0, %c0_0] : memref<16x512xbf16, #tpu.memory_space<vmem>>, vector<16x512xbf16>
    %c0_1 = arith.constant 0 : index
    %c0_2 = arith.constant 0 : index
    %1 = vector.load %arg3[%c0_1, %c0_2] : memref<1x512xf32, #tpu.memory_space<vmem>>, vector<1x512xf32>
    %2 = vector.shape_cast %1 : vector<1x512xf32> to vector<1x512xf32>
    %3 = vector.broadcast %2 : vector<1x512xf32> to vector<2x512xf32>
    %cst = arith.constant 0.000000e+00 : f32
    %4 = vector.broadcast %cst : f32 to vector<2x128xf32>
    %cst_3 = arith.constant 0.000000e+00 : f32
    %5 = vector.broadcast %cst_3 : f32 to vector<2x128xf32>
    %c0_4 = arith.constant 0 : index
    %c0_5 = arith.constant 0 : index
    %c0_6 = arith.constant 0 : index
    %6 = vector.load %arg0[%c0_4, %c0_5, %c0_6] : memref<2x8x16xf32, #tpu.memory_space<vmem>>, vector<2x1x16xf32>
    %7 = vector.shape_cast %6 : vector<2x1x16xf32> to vector<2x16xf32>
    %8 = arith.truncf %7 : vector<2x16xf32> to vector<2x16xbf16>
    %cst_7 = arith.constant dense<0.000000e+00> : vector<2x512xf32>
    %9 = tpu.matmul %8, %0, %cst_7 {dimension_numbers = #tpu.dot_dimension_numbers<[1], [0], [0], [1], [0, 0, 1, 1], [], []>} : vector<2x16xbf16>, vector<16x512xbf16>, vector<2x512xf32> -> vector<2x512xf32>
    %10 = arith.truncf %4 : vector<2x128xf32> to vector<2x128xbf16>
    %c0_8 = arith.constant 0 : index
    %c0_9 = arith.constant 0 : index
    %11 = vector.load %arg2[%c0_8, %c0_9] : memref<128x512xbf16, #tpu.memory_space<vmem>>, vector<128x512xbf16>
    %cst_10 = arith.constant dense<0.000000e+00> : vector<2x512xf32>
    %12 = tpu.matmul %10, %11, %cst_10 {dimension_numbers = #tpu.dot_dimension_numbers<[1], [0], [0], [1], [0, 0, 1, 1], [], []>} : vector<2x128xbf16>, vector<128x512xbf16>, vector<2x512xf32> -> vector<2x512xf32>
    %13 = arith.addf %9, %12 : vector<2x512xf32>
    %14 = arith.addf %13, %3 : vector<2x512xf32>
    %15 = vector.extract_strided_slice %14 {offsets = [0, 0], sizes = [2, 128], strides = [1, 1]} : vector<2x512xf32> to vector<2x128xf32>
    %16 = arith.negf %15 : vector<2x128xf32>
    %17 = math.exp %16 : vector<2x128xf32>
    %cst_11 = arith.constant 1.000000e+00 : f32
    %18 = vector.broadcast %cst_11 : f32 to vector<2x128xf32>
    %19 = arith.addf %18, %17 : vector<2x128xf32>
    %20 = arith.divf %18, %19 : vector<2x128xf32>
    %21 = vector.extract_strided_slice %14 {offsets = [0, 128], sizes = [2, 128], strides = [1, 1]} : vector<2x512xf32> to vector<2x128xf32>
    %22 = arith.negf %21 : vector<2x128xf32>
    %23 = math.exp %22 : vector<2x128xf32>
    %cst_12 = arith.constant 1.000000e+00 : f32
    %24 = vector.broadcast %cst_12 : f32 to vector<2x128xf32>
    %25 = arith.addf %24, %23 : vector<2x128xf32>
    %26 = arith.divf %24, %25 : vector<2x128xf32>
    %27 = vector.extract_strided_slice %14 {offsets = [0, 256], sizes = [2, 128], strides = [1, 1]} : vector<2x512xf32> to vector<2x128xf32>
    %28 = math.tanh %27 : vector<2x128xf32>
    %29 = vector.extract_strided_slice %14 {offsets = [0, 384], sizes = [2, 128], strides = [1, 1]} : vector<2x512xf32> to vector<2x128xf32>
    %30 = arith.negf %29 : vector<2x128xf32>
    %31 = math.exp %30 : vector<2x128xf32>
    %cst_13 = arith.constant 1.000000e+00 : f32
    %32 = vector.broadcast %cst_13 : f32 to vector<2x128xf32>
    %33 = arith.addf %32, %31 : vector<2x128xf32>
    %34 = arith.divf %32, %33 : vector<2x128xf32>
    %35 = arith.mulf %26, %5 : vector<2x128xf32>
    %36 = arith.mulf %20, %28 : vector<2x128xf32>
    %37 = arith.addf %35, %36 : vector<2x128xf32>
    %38 = math.tanh %37 : vector<2x128xf32>
    %39 = arith.mulf %34, %38 : vector<2x128xf32>
    %c0_14 = arith.constant 0 : index
    %c1 = arith.constant 1 : index
    %c0_15 = arith.constant 0 : index
    %40 = vector.load %arg0[%c0_14, %c1, %c0_15] : memref<2x8x16xf32, #tpu.memory_space<vmem>>, vector<2x1x16xf32>
    %41 = vector.shape_cast %40 : vector<2x1x16xf32> to vector<2x16xf32>
    %42 = arith.truncf %41 : vector<2x16xf32> to vector<2x16xbf16>
    %cst_16 = arith.constant dense<0.000000e+00> : vector<2x512xf32>
    %43 = tpu.matmul %42, %0, %cst_16 {dimension_numbers = #tpu.dot_dimension_numbers<[1], [0], [0], [1], [0, 0, 1, 1], [], []>} : vector<2x16xbf16>, vector<16x512xbf16>, vector<2x512xf32> -> vector<2x512xf32>
    %44 = arith.truncf %39 : vector<2x128xf32> to vector<2x128xbf16>
    %c0_17 = arith.constant 0 : index
    %c0_18 = arith.constant 0 : index
    %45 = vector.load %arg2[%c0_17, %c0_18] : memref<128x512xbf16, #tpu.memory_space<vmem>>, vector<128x512xbf16>
    %cst_19 = arith.constant dense<0.000000e+00> : vector<2x512xf32>
    %46 = tpu.matmul %44, %45, %cst_19 {dimension_numbers = #tpu.dot_dimension_numbers<[1], [0], [0], [1], [0, 0, 1, 1], [], []>} : vector<2x128xbf16>, vector<128x512xbf16>, vector<2x512xf32> -> vector<2x512xf32>
    %47 = arith.addf %43, %46 : vector<2x512xf32>
    %48 = arith.addf %47, %3 : vector<2x512xf32>
    %49 = vector.extract_strided_slice %48 {offsets = [0, 0], sizes = [2, 128], strides = [1, 1]} : vector<2x512xf32> to vector<2x128xf32>
    %50 = arith.negf %49 : vector<2x128xf32>
    %51 = math.exp %50 : vector<2x128xf32>
    %cst_20 = arith.constant 1.000000e+00 : f32
    %52 = vector.broadcast %cst_20 : f32 to vector<2x128xf32>
    %53 = arith.addf %52, %51 : vector<2x128xf32>
    %54 = arith.divf %52, %53 : vector<2x128xf32>
    %55 = vector.extract_strided_slice %48 {offsets = [0, 128], sizes = [2, 128], strides = [1, 1]} : vector<2x512xf32> to vector<2x128xf32>
    %56 = arith.negf %55 : vector<2x128xf32>
    %57 = math.exp %56 : vector<2x128xf32>
    %cst_21 = arith.constant 1.000000e+00 : f32
    %58 = vector.broadcast %cst_21 : f32 to vector<2x128xf32>
    %59 = arith.addf %58, %57 : vector<2x128xf32>
    %60 = arith.divf %58, %59 : vector<2x128xf32>
    %61 = vector.extract_strided_slice %48 {offsets = [0, 256], sizes = [2, 128], strides = [1, 1]} : vector<2x512xf32> to vector<2x128xf32>
    %62 = math.tanh %61 : vector<2x128xf32>
    %63 = vector.extract_strided_slice %48 {offsets = [0, 384], sizes = [2, 128], strides = [1, 1]} : vector<2x512xf32> to vector<2x128xf32>
    %64 = arith.negf %63 : vector<2x128xf32>
    %65 = math.exp %64 : vector<2x128xf32>
    %cst_22 = arith.constant 1.000000e+00 : f32
    %66 = vector.broadcast %cst_22 : f32 to vector<2x128xf32>
    %67 = arith.addf %66, %65 : vector<2x128xf32>
    %68 = arith.divf %66, %67 : vector<2x128xf32>
    %69 = arith.mulf %60, %37 : vector<2x128xf32>
    %70 = arith.mulf %54, %62 : vector<2x128xf32>
    %71 = arith.addf %69, %70 : vector<2x128xf32>
    %72 = math.tanh %71 : vector<2x128xf32>
    %73 = arith.mulf %68, %72 : vector<2x128xf32>
    %c0_23 = arith.constant 0 : index
    %c2 = arith.constant 2 : index
    %c0_24 = arith.constant 0 : index
    %74 = vector.load %arg0[%c0_23, %c2, %c0_24] : memref<2x8x16xf32, #tpu.memory_space<vmem>>, vector<2x1x16xf32>
    %75 = vector.shape_cast %74 : vector<2x1x16xf32> to vector<2x16xf32>
    %76 = arith.truncf %75 : vector<2x16xf32> to vector<2x16xbf16>
    %cst_25 = arith.constant dense<0.000000e+00> : vector<2x512xf32>
    %77 = tpu.matmul %76, %0, %cst_25 {dimension_numbers = #tpu.dot_dimension_numbers<[1], [0], [0], [1], [0, 0, 1, 1], [], []>} : vector<2x16xbf16>, vector<16x512xbf16>, vector<2x512xf32> -> vector<2x512xf32>
    %78 = arith.truncf %73 : vector<2x128xf32> to vector<2x128xbf16>
    %c0_26 = arith.constant 0 : index
    %c0_27 = arith.constant 0 : index
    %79 = vector.load %arg2[%c0_26, %c0_27] : memref<128x512xbf16, #tpu.memory_space<vmem>>, vector<128x512xbf16>
    %cst_28 = arith.constant dense<0.000000e+00> : vector<2x512xf32>
    %80 = tpu.matmul %78, %79, %cst_28 {dimension_numbers = #tpu.dot_dimension_numbers<[1], [0], [0], [1], [0, 0, 1, 1], [], []>} : vector<2x128xbf16>, vector<128x512xbf16>, vector<2x512xf32> -> vector<2x512xf32>
    %81 = arith.addf %77, %80 : vector<2x512xf32>
    %82 = arith.addf %81, %3 : vector<2x512xf32>
    %83 = vector.extract_strided_slice %82 {offsets = [0, 0], sizes = [2, 128], strides = [1, 1]} : vector<2x512xf32> to vector<2x128xf32>
    %84 = arith.negf %83 : vector<2x128xf32>
    %85 = math.exp %84 : vector<2x128xf32>
    %cst_29 = arith.constant 1.000000e+00 : f32
    %86 = vector.broadcast %cst_29 : f32 to vector<2x128xf32>
    %87 = arith.addf %86, %85 : vector<2x128xf32>
    %88 = arith.divf %86, %87 : vector<2x128xf32>
    %89 = vector.extract_strided_slice %82 {offsets = [0, 128], sizes = [2, 128], strides = [1, 1]} : vector<2x512xf32> to vector<2x128xf32>
    %90 = arith.negf %89 : vector<2x128xf32>
    %91 = math.exp %90 : vector<2x128xf32>
    %cst_30 = arith.constant 1.000000e+00 : f32
    %92 = vector.broadcast %cst_30 : f32 to vector<2x128xf32>
    %93 = arith.addf %92, %91 : vector<2x128xf32>
    %94 = arith.divf %92, %93 : vector<2x128xf32>
    %95 = vector.extract_strided_slice %82 {offsets = [0, 256], sizes = [2, 128], strides = [1, 1]} : vector<2x512xf32> to vector<2x128xf32>
    %96 = math.tanh %95 : vector<2x128xf32>
    %97 = vector.extract_strided_slice %82 {offsets = [0, 384], sizes = [2, 128], strides = [1, 1]} : vector<2x512xf32> to vector<2x128xf32>
    %98 = arith.negf %97 : vector<2x128xf32>
    %99 = math.exp %98 : vector<2x128xf32>
    %cst_31 = arith.constant 1.000000e+00 : f32
    %100 = vector.broadcast %cst_31 : f32 to vector<2x128xf32>
    %101 = arith.addf %100, %99 : vector<2x128xf32>
    %102 = arith.divf %100, %101 : vector<2x128xf32>
    %103 = arith.mulf %94, %71 : vector<2x128xf32>
    %104 = arith.mulf %88, %96 : vector<2x128xf32>
    %105 = arith.addf %103, %104 : vector<2x128xf32>
    %106 = math.tanh %105 : vector<2x128xf32>
    %107 = arith.mulf %102, %106 : vector<2x128xf32>
    %c0_32 = arith.constant 0 : index
    %c3 = arith.constant 3 : index
    %c0_33 = arith.constant 0 : index
    %108 = vector.load %arg0[%c0_32, %c3, %c0_33] : memref<2x8x16xf32, #tpu.memory_space<vmem>>, vector<2x1x16xf32>
    %109 = vector.shape_cast %108 : vector<2x1x16xf32> to vector<2x16xf32>
    %110 = arith.truncf %109 : vector<2x16xf32> to vector<2x16xbf16>
    %cst_34 = arith.constant dense<0.000000e+00> : vector<2x512xf32>
    %111 = tpu.matmul %110, %0, %cst_34 {dimension_numbers = #tpu.dot_dimension_numbers<[1], [0], [0], [1], [0, 0, 1, 1], [], []>} : vector<2x16xbf16>, vector<16x512xbf16>, vector<2x512xf32> -> vector<2x512xf32>
    %112 = arith.truncf %107 : vector<2x128xf32> to vector<2x128xbf16>
    %c0_35 = arith.constant 0 : index
    %c0_36 = arith.constant 0 : index
    %113 = vector.load %arg2[%c0_35, %c0_36] : memref<128x512xbf16, #tpu.memory_space<vmem>>, vector<128x512xbf16>
    %cst_37 = arith.constant dense<0.000000e+00> : vector<2x512xf32>
    %114 = tpu.matmul %112, %113, %cst_37 {dimension_numbers = #tpu.dot_dimension_numbers<[1], [0], [0], [1], [0, 0, 1, 1], [], []>} : vector<2x128xbf16>, vector<128x512xbf16>, vector<2x512xf32> -> vector<2x512xf32>
    %115 = arith.addf %111, %114 : vector<2x512xf32>
    %116 = arith.addf %115, %3 : vector<2x512xf32>
    %117 = vector.extract_strided_slice %116 {offsets = [0, 0], sizes = [2, 128], strides = [1, 1]} : vector<2x512xf32> to vector<2x128xf32>
    %118 = arith.negf %117 : vector<2x128xf32>
    %119 = math.exp %118 : vector<2x128xf32>
    %cst_38 = arith.constant 1.000000e+00 : f32
    %120 = vector.broadcast %cst_38 : f32 to vector<2x128xf32>
    %121 = arith.addf %120, %119 : vector<2x128xf32>
    %122 = arith.divf %120, %121 : vector<2x128xf32>
    %123 = vector.extract_strided_slice %116 {offsets = [0, 128], sizes = [2, 128], strides = [1, 1]} : vector<2x512xf32> to vector<2x128xf32>
    %124 = arith.negf %123 : vector<2x128xf32>
    %125 = math.exp %124 : vector<2x128xf32>
    %cst_39 = arith.constant 1.000000e+00 : f32
    %126 = vector.broadcast %cst_39 : f32 to vector<2x128xf32>
    %127 = arith.addf %126, %125 : vector<2x128xf32>
    %128 = arith.divf %126, %127 : vector<2x128xf32>
    %129 = vector.extract_strided_slice %116 {offsets = [0, 256], sizes = [2, 128], strides = [1, 1]} : vector<2x512xf32> to vector<2x128xf32>
    %130 = math.tanh %129 : vector<2x128xf32>
    %131 = vector.extract_strided_slice %116 {offsets = [0, 384], sizes = [2, 128], strides = [1, 1]} : vector<2x512xf32> to vector<2x128xf32>
    %132 = arith.negf %131 : vector<2x128xf32>
    %133 = math.exp %132 : vector<2x128xf32>
    %cst_40 = arith.constant 1.000000e+00 : f32
    %134 = vector.broadcast %cst_40 : f32 to vector<2x128xf32>
    %135 = arith.addf %134, %133 : vector<2x128xf32>
    %136 = arith.divf %134, %135 : vector<2x128xf32>
    %137 = arith.mulf %128, %105 : vector<2x128xf32>
    %138 = arith.mulf %122, %130 : vector<2x128xf32>
    %139 = arith.addf %137, %138 : vector<2x128xf32>
    %140 = math.tanh %139 : vector<2x128xf32>
    %141 = arith.mulf %136, %140 : vector<2x128xf32>
    %c0_41 = arith.constant 0 : index
    %c4 = arith.constant 4 : index
    %c0_42 = arith.constant 0 : index
    %142 = vector.load %arg0[%c0_41, %c4, %c0_42] : memref<2x8x16xf32, #tpu.memory_space<vmem>>, vector<2x1x16xf32>
    %143 = vector.shape_cast %142 : vector<2x1x16xf32> to vector<2x16xf32>
    %144 = arith.truncf %143 : vector<2x16xf32> to vector<2x16xbf16>
    %cst_43 = arith.constant dense<0.000000e+00> : vector<2x512xf32>
    %145 = tpu.matmul %144, %0, %cst_43 {dimension_numbers = #tpu.dot_dimension_numbers<[1], [0], [0], [1], [0, 0, 1, 1], [], []>} : vector<2x16xbf16>, vector<16x512xbf16>, vector<2x512xf32> -> vector<2x512xf32>
    %146 = arith.truncf %141 : vector<2x128xf32> to vector<2x128xbf16>
    %c0_44 = arith.constant 0 : index
    %c0_45 = arith.constant 0 : index
    %147 = vector.load %arg2[%c0_44, %c0_45] : memref<128x512xbf16, #tpu.memory_space<vmem>>, vector<128x512xbf16>
    %cst_46 = arith.constant dense<0.000000e+00> : vector<2x512xf32>
    %148 = tpu.matmul %146, %147, %cst_46 {dimension_numbers = #tpu.dot_dimension_numbers<[1], [0], [0], [1], [0, 0, 1, 1], [], []>} : vector<2x128xbf16>, vector<128x512xbf16>, vector<2x512xf32> -> vector<2x512xf32>
    %149 = arith.addf %145, %148 : vector<2x512xf32>
    %150 = arith.addf %149, %3 : vector<2x512xf32>
    %151 = vector.extract_strided_slice %150 {offsets = [0, 0], sizes = [2, 128], strides = [1, 1]} : vector<2x512xf32> to vector<2x128xf32>
    %152 = arith.negf %151 : vector<2x128xf32>
    %153 = math.exp %152 : vector<2x128xf32>
    %cst_47 = arith.constant 1.000000e+00 : f32
    %154 = vector.broadcast %cst_47 : f32 to vector<2x128xf32>
    %155 = arith.addf %154, %153 : vector<2x128xf32>
    %156 = arith.divf %154, %155 : vector<2x128xf32>
    %157 = vector.extract_strided_slice %150 {offsets = [0, 128], sizes = [2, 128], strides = [1, 1]} : vector<2x512xf32> to vector<2x128xf32>
    %158 = arith.negf %157 : vector<2x128xf32>
    %159 = math.exp %158 : vector<2x128xf32>
    %cst_48 = arith.constant 1.000000e+00 : f32
    %160 = vector.broadcast %cst_48 : f32 to vector<2x128xf32>
    %161 = arith.addf %160, %159 : vector<2x128xf32>
    %162 = arith.divf %160, %161 : vector<2x128xf32>
    %163 = vector.extract_strided_slice %150 {offsets = [0, 256], sizes = [2, 128], strides = [1, 1]} : vector<2x512xf32> to vector<2x128xf32>
    %164 = math.tanh %163 : vector<2x128xf32>
    %165 = vector.extract_strided_slice %150 {offsets = [0, 384], sizes = [2, 128], strides = [1, 1]} : vector<2x512xf32> to vector<2x128xf32>
    %166 = arith.negf %165 : vector<2x128xf32>
    %167 = math.exp %166 : vector<2x128xf32>
    %cst_49 = arith.constant 1.000000e+00 : f32
    %168 = vector.broadcast %cst_49 : f32 to vector<2x128xf32>
    %169 = arith.addf %168, %167 : vector<2x128xf32>
    %170 = arith.divf %168, %169 : vector<2x128xf32>
    %171 = arith.mulf %162, %139 : vector<2x128xf32>
    %172 = arith.mulf %156, %164 : vector<2x128xf32>
    %173 = arith.addf %171, %172 : vector<2x128xf32>
    %174 = math.tanh %173 : vector<2x128xf32>
    %175 = arith.mulf %170, %174 : vector<2x128xf32>
    %c0_50 = arith.constant 0 : index
    %c5 = arith.constant 5 : index
    %c0_51 = arith.constant 0 : index
    %176 = vector.load %arg0[%c0_50, %c5, %c0_51] : memref<2x8x16xf32, #tpu.memory_space<vmem>>, vector<2x1x16xf32>
    %177 = vector.shape_cast %176 : vector<2x1x16xf32> to vector<2x16xf32>
    %178 = arith.truncf %177 : vector<2x16xf32> to vector<2x16xbf16>
    %cst_52 = arith.constant dense<0.000000e+00> : vector<2x512xf32>
    %179 = tpu.matmul %178, %0, %cst_52 {dimension_numbers = #tpu.dot_dimension_numbers<[1], [0], [0], [1], [0, 0, 1, 1], [], []>} : vector<2x16xbf16>, vector<16x512xbf16>, vector<2x512xf32> -> vector<2x512xf32>
    %180 = arith.truncf %175 : vector<2x128xf32> to vector<2x128xbf16>
    %c0_53 = arith.constant 0 : index
    %c0_54 = arith.constant 0 : index
    %181 = vector.load %arg2[%c0_53, %c0_54] : memref<128x512xbf16, #tpu.memory_space<vmem>>, vector<128x512xbf16>
    %cst_55 = arith.constant dense<0.000000e+00> : vector<2x512xf32>
    %182 = tpu.matmul %180, %181, %cst_55 {dimension_numbers = #tpu.dot_dimension_numbers<[1], [0], [0], [1], [0, 0, 1, 1], [], []>} : vector<2x128xbf16>, vector<128x512xbf16>, vector<2x512xf32> -> vector<2x512xf32>
    %183 = arith.addf %179, %182 : vector<2x512xf32>
    %184 = arith.addf %183, %3 : vector<2x512xf32>
    %185 = vector.extract_strided_slice %184 {offsets = [0, 0], sizes = [2, 128], strides = [1, 1]} : vector<2x512xf32> to vector<2x128xf32>
    %186 = arith.negf %185 : vector<2x128xf32>
    %187 = math.exp %186 : vector<2x128xf32>
    %cst_56 = arith.constant 1.000000e+00 : f32
    %188 = vector.broadcast %cst_56 : f32 to vector<2x128xf32>
    %189 = arith.addf %188, %187 : vector<2x128xf32>
    %190 = arith.divf %188, %189 : vector<2x128xf32>
    %191 = vector.extract_strided_slice %184 {offsets = [0, 128], sizes = [2, 128], strides = [1, 1]} : vector<2x512xf32> to vector<2x128xf32>
    %192 = arith.negf %191 : vector<2x128xf32>
    %193 = math.exp %192 : vector<2x128xf32>
    %cst_57 = arith.constant 1.000000e+00 : f32
    %194 = vector.broadcast %cst_57 : f32 to vector<2x128xf32>
    %195 = arith.addf %194, %193 : vector<2x128xf32>
    %196 = arith.divf %194, %195 : vector<2x128xf32>
    %197 = vector.extract_strided_slice %184 {offsets = [0, 256], sizes = [2, 128], strides = [1, 1]} : vector<2x512xf32> to vector<2x128xf32>
    %198 = math.tanh %197 : vector<2x128xf32>
    %199 = vector.extract_strided_slice %184 {offsets = [0, 384], sizes = [2, 128], strides = [1, 1]} : vector<2x512xf32> to vector<2x128xf32>
    %200 = arith.negf %199 : vector<2x128xf32>
    %201 = math.exp %200 : vector<2x128xf32>
    %cst_58 = arith.constant 1.000000e+00 : f32
    %202 = vector.broadcast %cst_58 : f32 to vector<2x128xf32>
    %203 = arith.addf %202, %201 : vector<2x128xf32>
    %204 = arith.divf %202, %203 : vector<2x128xf32>
    %205 = arith.mulf %196, %173 : vector<2x128xf32>
    %206 = arith.mulf %190, %198 : vector<2x128xf32>
    %207 = arith.addf %205, %206 : vector<2x128xf32>
    %208 = math.tanh %207 : vector<2x128xf32>
    %209 = arith.mulf %204, %208 : vector<2x128xf32>
    %c0_59 = arith.constant 0 : index
    %c6 = arith.constant 6 : index
    %c0_60 = arith.constant 0 : index
    %210 = vector.load %arg0[%c0_59, %c6, %c0_60] : memref<2x8x16xf32, #tpu.memory_space<vmem>>, vector<2x1x16xf32>
    %211 = vector.shape_cast %210 : vector<2x1x16xf32> to vector<2x16xf32>
    %212 = arith.truncf %211 : vector<2x16xf32> to vector<2x16xbf16>
    %cst_61 = arith.constant dense<0.000000e+00> : vector<2x512xf32>
    %213 = tpu.matmul %212, %0, %cst_61 {dimension_numbers = #tpu.dot_dimension_numbers<[1], [0], [0], [1], [0, 0, 1, 1], [], []>} : vector<2x16xbf16>, vector<16x512xbf16>, vector<2x512xf32> -> vector<2x512xf32>
    %214 = arith.truncf %209 : vector<2x128xf32> to vector<2x128xbf16>
    %c0_62 = arith.constant 0 : index
    %c0_63 = arith.constant 0 : index
    %215 = vector.load %arg2[%c0_62, %c0_63] : memref<128x512xbf16, #tpu.memory_space<vmem>>, vector<128x512xbf16>
    %cst_64 = arith.constant dense<0.000000e+00> : vector<2x512xf32>
    %216 = tpu.matmul %214, %215, %cst_64 {dimension_numbers = #tpu.dot_dimension_numbers<[1], [0], [0], [1], [0, 0, 1, 1], [], []>} : vector<2x128xbf16>, vector<128x512xbf16>, vector<2x512xf32> -> vector<2x512xf32>
    %217 = arith.addf %213, %216 : vector<2x512xf32>
    %218 = arith.addf %217, %3 : vector<2x512xf32>
    %219 = vector.extract_strided_slice %218 {offsets = [0, 0], sizes = [2, 128], strides = [1, 1]} : vector<2x512xf32> to vector<2x128xf32>
    %220 = arith.negf %219 : vector<2x128xf32>
    %221 = math.exp %220 : vector<2x128xf32>
    %cst_65 = arith.constant 1.000000e+00 : f32
    %222 = vector.broadcast %cst_65 : f32 to vector<2x128xf32>
    %223 = arith.addf %222, %221 : vector<2x128xf32>
    %224 = arith.divf %222, %223 : vector<2x128xf32>
    %225 = vector.extract_strided_slice %218 {offsets = [0, 128], sizes = [2, 128], strides = [1, 1]} : vector<2x512xf32> to vector<2x128xf32>
    %226 = arith.negf %225 : vector<2x128xf32>
    %227 = math.exp %226 : vector<2x128xf32>
    %cst_66 = arith.constant 1.000000e+00 : f32
    %228 = vector.broadcast %cst_66 : f32 to vector<2x128xf32>
    %229 = arith.addf %228, %227 : vector<2x128xf32>
    %230 = arith.divf %228, %229 : vector<2x128xf32>
    %231 = vector.extract_strided_slice %218 {offsets = [0, 256], sizes = [2, 128], strides = [1, 1]} : vector<2x512xf32> to vector<2x128xf32>
    %232 = math.tanh %231 : vector<2x128xf32>
    %233 = vector.extract_strided_slice %218 {offsets = [0, 384], sizes = [2, 128], strides = [1, 1]} : vector<2x512xf32> to vector<2x128xf32>
    %234 = arith.negf %233 : vector<2x128xf32>
    %235 = math.exp %234 : vector<2x128xf32>
    %cst_67 = arith.constant 1.000000e+00 : f32
    %236 = vector.broadcast %cst_67 : f32 to vector<2x128xf32>
    %237 = arith.addf %236, %235 : vector<2x128xf32>
    %238 = arith.divf %236, %237 : vector<2x128xf32>
    %239 = arith.mulf %230, %207 : vector<2x128xf32>
    %240 = arith.mulf %224, %232 : vector<2x128xf32>
    %241 = arith.addf %239, %240 : vector<2x128xf32>
    %242 = math.tanh %241 : vector<2x128xf32>
    %243 = arith.mulf %238, %242 : vector<2x128xf32>
    %c0_68 = arith.constant 0 : index
    %c7 = arith.constant 7 : index
    %c0_69 = arith.constant 0 : index
    %244 = vector.load %arg0[%c0_68, %c7, %c0_69] : memref<2x8x16xf32, #tpu.memory_space<vmem>>, vector<2x1x16xf32>
    %245 = vector.shape_cast %244 : vector<2x1x16xf32> to vector<2x16xf32>
    %246 = arith.truncf %245 : vector<2x16xf32> to vector<2x16xbf16>
    %cst_70 = arith.constant dense<0.000000e+00> : vector<2x512xf32>
    %247 = tpu.matmul %246, %0, %cst_70 {dimension_numbers = #tpu.dot_dimension_numbers<[1], [0], [0], [1], [0, 0, 1, 1], [], []>} : vector<2x16xbf16>, vector<16x512xbf16>, vector<2x512xf32> -> vector<2x512xf32>
    %248 = arith.truncf %243 : vector<2x128xf32> to vector<2x128xbf16>
    %c0_71 = arith.constant 0 : index
    %c0_72 = arith.constant 0 : index
    %249 = vector.load %arg2[%c0_71, %c0_72] : memref<128x512xbf16, #tpu.memory_space<vmem>>, vector<128x512xbf16>
    %cst_73 = arith.constant dense<0.000000e+00> : vector<2x512xf32>
    %250 = tpu.matmul %248, %249, %cst_73 {dimension_numbers = #tpu.dot_dimension_numbers<[1], [0], [0], [1], [0, 0, 1, 1], [], []>} : vector<2x128xbf16>, vector<128x512xbf16>, vector<2x512xf32> -> vector<2x512xf32>
    %251 = arith.addf %247, %250 : vector<2x512xf32>
    %252 = arith.addf %251, %3 : vector<2x512xf32>
    %253 = vector.extract_strided_slice %252 {offsets = [0, 0], sizes = [2, 128], strides = [1, 1]} : vector<2x512xf32> to vector<2x128xf32>
    %254 = arith.negf %253 : vector<2x128xf32>
    %255 = math.exp %254 : vector<2x128xf32>
    %cst_74 = arith.constant 1.000000e+00 : f32
    %256 = vector.broadcast %cst_74 : f32 to vector<2x128xf32>
    %257 = arith.addf %256, %255 : vector<2x128xf32>
    %258 = arith.divf %256, %257 : vector<2x128xf32>
    %259 = vector.extract_strided_slice %252 {offsets = [0, 128], sizes = [2, 128], strides = [1, 1]} : vector<2x512xf32> to vector<2x128xf32>
    %260 = arith.negf %259 : vector<2x128xf32>
    %261 = math.exp %260 : vector<2x128xf32>
    %cst_75 = arith.constant 1.000000e+00 : f32
    %262 = vector.broadcast %cst_75 : f32 to vector<2x128xf32>
    %263 = arith.addf %262, %261 : vector<2x128xf32>
    %264 = arith.divf %262, %263 : vector<2x128xf32>
    %265 = vector.extract_strided_slice %252 {offsets = [0, 256], sizes = [2, 128], strides = [1, 1]} : vector<2x512xf32> to vector<2x128xf32>
    %266 = math.tanh %265 : vector<2x128xf32>
    %267 = vector.extract_strided_slice %252 {offsets = [0, 384], sizes = [2, 128], strides = [1, 1]} : vector<2x512xf32> to vector<2x128xf32>
    %268 = arith.negf %267 : vector<2x128xf32>
    %269 = math.exp %268 : vector<2x128xf32>
    %cst_76 = arith.constant 1.000000e+00 : f32
    %270 = vector.broadcast %cst_76 : f32 to vector<2x128xf32>
    %271 = arith.addf %270, %269 : vector<2x128xf32>
    %272 = arith.divf %270, %271 : vector<2x128xf32>
    %273 = arith.mulf %264, %241 : vector<2x128xf32>
    %274 = arith.mulf %258, %266 : vector<2x128xf32>
    %275 = arith.addf %273, %274 : vector<2x128xf32>
    %276 = math.tanh %275 : vector<2x128xf32>
    %277 = arith.mulf %272, %276 : vector<2x128xf32>
    %c0_77 = arith.constant 0 : index
    %c0_78 = arith.constant 0 : index
    %278 = vector.load %arg4[%c0_77, %c0_78] : memref<128x4xf32, #tpu.memory_space<vmem>>, vector<128x4xf32>
    %cst_79 = arith.constant dense<0.000000e+00> : vector<2x4xf32>
    %279 = tpu.matmul %277, %278, %cst_79 {dimension_numbers = #tpu.dot_dimension_numbers<[1], [0], [0], [1], [0, 0, 1, 1], [], []>} : vector<2x128xf32>, vector<128x4xf32>, vector<2x4xf32> -> vector<2x4xf32>
    %c0_80 = arith.constant 0 : index
    %c0_81 = arith.constant 0 : index
    %280 = vector.load %arg5[%c0_80, %c0_81] : memref<1x4xf32, #tpu.memory_space<vmem>>, vector<1x4xf32>
    %281 = vector.broadcast %280 : vector<1x4xf32> to vector<2x4xf32>
    %282 = arith.addf %279, %281 : vector<2x4xf32>
    %cst_82 = arith.constant 0.000000e+00 : f32
    %283 = vector.broadcast %cst_82 : f32 to vector<2x4xf32>
    %284 = arith.cmpf ogt, %282, %283 : vector<2x4xf32>
    %cst_83 = arith.constant 0.00999999977 : f32
    %285 = vector.broadcast %cst_83 : f32 to vector<2x4xf32>
    %286 = arith.mulf %285, %282 : vector<2x4xf32>
    %287 = arith.select %284, %282, %286 : vector<2x4xi1>, vector<2x4xf32>
    %c0_84 = arith.constant 0 : index
    %c0_85 = arith.constant 0 : index
    %288 = vector.load %arg6[%c0_84, %c0_85] : memref<2x4xf32, #tpu.memory_space<vmem>>, vector<2x4xf32>
    tpu.vector_store %arg6[%c0_84, %c0_85], %287 {strides = array<i32>} : memref<2x4xf32, #tpu.memory_space<vmem>>, vector<2x4xf32>,
    return
  }
}

</mosaic_0001>

<llo_original>
// kernel: dqn_lstm_forward.1
$region0: #{dqn_lstm_forward.1}
  #allocation0 [shape = 'u32[]', space=smem, size = 0x4, offset = 0x4, fixed_abs, tag = 'smem constant byte address 0x4 - core index']
  #allocation1 [shape = 'u32[144,128]{1,0:T(1,128)}', space=vmem, size = 0x12000, scoped, tag = 'internal scratch']
  %s0 = inlined_call_operand.vmem [shape: f32[2,8,16], index: 0, kind: input, shape index: {}]
  %s1 = inlined_call_operand.vmem [shape: bf16[16,512], index: 1, kind: input, shape index: {}]
  %s2 = inlined_call_operand.hbm [shape: bf16[128,512], index: 2, kind: input, shape index: {}]
  %s3 = inlined_call_operand.vmem [shape: f32[1,512], index: 3, kind: input, shape index: {}]
  %s4 = inlined_call_operand.vmem [shape: f32[128,4], index: 4, kind: input, shape index: {}]
  %s5 = inlined_call_operand.vmem [shape: f32[1,4], index: 5, kind: input, shape index: {}]
  %s6 = inlined_call_operand.hbm [shape: f32[2,4], index: 6, kind: output, shape index: {}]
  %s7 = sld [smem:[#allocation0]]
  $region38: #{dqn_lstm_forward.1} parent=0
    _
  %s9 = ssub.s32 1, %s7
  %s10 = scalar_select 0, %s9, %s7
  $region1: #{dqn_lstm_forward.1} parent=0
    #allocation2 [shape = 'u8[131072]{0}', space=vmem, size = 0x20000, scoped, tag = 'input window, operand 2, single buffered']
    #allocation3 [shape = 's32[1]{0}', space=sflag, size = 0x4, scoped, tag = 'scoped memory for dqn_lstm_forward.1']
    #allocation4 [shape = 's32[1]{0}', space=sflag, size = 0x4, scoped, tag = 'scoped memory for dqn_lstm_forward.1']
    #allocation5 [shape = 'u8[1024]{0}', space=vmem, size = 0x400, scoped, tag = 'output window, operand 0, single buffered']
    %11 = vsyncpa [#allocation3], 0
    %12 = vsyncpa [#allocation4], 0
    // Predicated region
    $region2: #{dqn_lstm_forward.1} parent=1 // pred_check
      _
    $region3: #{dqn_lstm_forward.1} parent=1 // pred_check_branch
      %14 = sbr.rel (0) target = $region5
    $region4: #{dqn_lstm_forward.1} parent=1 // pred_region
      _
    $region5: #{dqn_lstm_forward.1} parent=1 // pred_fallthru
      _
    // Predicated region
    $region6: #{dqn_lstm_forward.1} parent=1 // pred_check
      _
    $region7: #{dqn_lstm_forward.1} parent=1 // pred_check_branch
      %16 = sbr.rel (0) target = $region9
    $region8: #{dqn_lstm_forward.1} parent=1 // pred_region
      _
    $region9: #{dqn_lstm_forward.1} parent=1 // pred_fallthru
      _
    // Predicated region
    $region10: #{dqn_lstm_forward.1} parent=1 // pred_check
      _
    $region11: #{dqn_lstm_forward.1} parent=1 // pred_check_branch
      %18 = sbr.rel (0) target = $region13
    $region12: #{dqn_lstm_forward.1} parent=1 // pred_region
      %s20 = ssub.s32 4096, 4096
      %21 = vsyncadd [#allocation3], %s20
      %s22 = sshll.u32 [#allocation2], 4
      %s23 = int_to_ptr.vmem [resolvable:$true] %s22
      %28 = dma.hbm_to_vmem [thread:$0]  %s2, 4096, %s23, [#allocation3], 256, 256, 16
    $region13: #{dqn_lstm_forward.1} parent=1 // pred_fallthru
      _
    // Predicated region
    $region14: #{dqn_lstm_forward.1} parent=1 // pred_check
      _
    $region15: #{dqn_lstm_forward.1} parent=1 // pred_check_branch
      %30 = sbr.rel (0) target = $region17
    $region16: #{dqn_lstm_forward.1} parent=1 // pred_region
      _
    $region17: #{dqn_lstm_forward.1} parent=1 // pred_fallthru
      _
    // Predicated region
    $region18: #{dqn_lstm_forward.1} parent=1 // pred_check
      _
    $region19: #{dqn_lstm_forward.1} parent=1 // pred_check_branch
      %32 = sbr.rel (0) target = $region21
    $region20: #{dqn_lstm_forward.1} parent=1 // pred_region
      _
    $region21: #{dqn_lstm_forward.1} parent=1 // pred_fallthru
      _
    // Predicated region
    $region22: #{dqn_lstm_forward.1} parent=1 // pred_check
      _
    $region23: #{dqn_lstm_forward.1} parent=1 // pred_check_branch
      %34 = sbr.rel (0) target = $region25
    $region24: #{dqn_lstm_forward.1} parent=1 // pred_region
      _
    $region25: #{dqn_lstm_forward.1} parent=1 // pred_fallthru
      _
    // Predicated region
    $region26: #{dqn_lstm_forward.1} parent=1 // pred_check
      _
    $region27: #{dqn_lstm_forward.1} parent=1 // pred_check_branch
      %36 = sbr.rel (0) target = $region29
    $region28: #{dqn_lstm_forward.1} parent=1 // pred_region
      %37 = dma.done [#allocation3], 4096
    $region29: #{dqn_lstm_forward.1} parent=1 // pred_fallthru
      _
    %v39 = vld [vmem:[%s1] sm:$0xff]
    %v40 = vld [vmem:[%s1 + $0x8] sm:$0xff]
    %v41 = vld [vmem:[%s1 + $0x10] sm:$0xff]
    %v42 = vld [vmem:[%s1 + $0x18] sm:$0xff]
    %v43 = vld [vmem:[%s3] sm:$0xf]
    %v45 = vlaneseq
    %v46 = vshrl.u32 %v45, 7
    %v47 = vsub.s32 0, %v46
    %v48 = vrot.slane %v43, %v47
    %v49 = vlaneseq
    %v50 = vshrl.u32 %v49, 7
    %v51 = vsub.s32 1, %v50
    %v52 = vrot.slane %v43, %v51
    %v53 = vlaneseq
    %v54 = vshrl.u32 %v53, 7
    %v55 = vsub.s32 2, %v54
    %v56 = vrot.slane %v43, %v55
    %v57 = vlaneseq
    %v58 = vshrl.u32 %v57, 7
    %v59 = vsub.s32 3, %v58
    %v60 = vrot.slane %v43, %v59
    %v65 = vld [vmem:[%s0] sm:$0x1]
    %v66 = vld [vmem:[%s0 + $0x8] sm:$0x1]
    %v67 = vpack.c.bf16 %v65, %v65
    %v68 = vpack.c.bf16 %v66, %v66
    %v69 = vld [vmem:[#allocation2] sm:$0xff]
    %v70 = vld [vmem:[#allocation2 + $0x8] sm:$0xff]
    %v71 = vld [vmem:[#allocation2 + $0x10] sm:$0xff]
    %v72 = vld [vmem:[#allocation2 + $0x18] sm:$0xff]
    %v73 = vld [vmem:[#allocation2 + $0x20] sm:$0xff]
    %v74 = vld [vmem:[#allocation2 + $0x28] sm:$0xff]
    %v75 = vld [vmem:[#allocation2 + $0x30] sm:$0xff]
    %v76 = vld [vmem:[#allocation2 + $0x38] sm:$0xff]
    %v77 = vld [vmem:[#allocation2 + $0x40] sm:$0xff]
    %v78 = vld [vmem:[#allocation2 + $0x48] sm:$0xff]
    %v79 = vld [vmem:[#allocation2 + $0x50] sm:$0xff]
    %v80 = vld [vmem:[#allocation2 + $0x58] sm:$0xff]
    %v81 = vld [vmem:[#allocation2 + $0x60] sm:$0xff]
    %v82 = vld [vmem:[#allocation2 + $0x68] sm:$0xff]
    %v83 = vld [vmem:[#allocation2 + $0x70] sm:$0xff]
    %v84 = vld [vmem:[#allocation2 + $0x78] sm:$0xff]
    %v85 = vld [vmem:[#allocation2 + $0x80] sm:$0xff]
    %v86 = vld [vmem:[#allocation2 + $0x88] sm:$0xff]
    %v87 = vld [vmem:[#allocation2 + $0x90] sm:$0xff]
    %v88 = vld [vmem:[#allocation2 + $0x98] sm:$0xff]
    %v89 = vld [vmem:[#allocation2 + $0xa0] sm:$0xff]
    %v90 = vld [vmem:[#allocation2 + $0xa8] sm:$0xff]
    %v91 = vld [vmem:[#allocation2 + $0xb0] sm:$0xff]
    %v92 = vld [vmem:[#allocation2 + $0xb8] sm:$0xff]
    %v93 = vld [vmem:[#allocation2 + $0xc0] sm:$0xff]
    %v94 = vld [vmem:[#allocation2 + $0xc8] sm:$0xff]
    %v95 = vld [vmem:[#allocation2 + $0xd0] sm:$0xff]
    %v96 = vld [vmem:[#allocation2 + $0xd8] sm:$0xff]
    %v97 = vld [vmem:[#allocation2 + $0xe0] sm:$0xff]
    %v98 = vld [vmem:[#allocation2 + $0xe8] sm:$0xff]
    %v99 = vld [vmem:[#allocation2 + $0xf0] sm:$0xff]
    %v100 = vld [vmem:[#allocation2 + $0xf8] sm:$0xff]
    %v133 = vunpack.c.l.b16 %v69
    %v134 = vunpack.c.h.b16 %v69
    %v135 = vunpack.c.l.b16 %v70
    %v136 = vunpack.c.h.b16 %v70
    %v137 = vunpack.c.l.b16 %v71
    %v138 = vunpack.c.h.b16 %v71
    %v139 = vunpack.c.l.b16 %v72
    %v140 = vunpack.c.h.b16 %v72
    %v141 = vunpack.c.l.b16 %v73
    %v142 = vunpack.c.h.b16 %v73
    %v143 = vunpack.c.l.b16 %v74
    %v144 = vunpack.c.h.b16 %v74
    %v145 = vunpack.c.l.b16 %v75
    %v146 = vunpack.c.h.b16 %v75
    %v147 = vunpack.c.l.b16 %v76
    %v148 = vunpack.c.h.b16 %v76
    %v149 = vunpack.c.l.b16 %v77
    %v150 = vunpack.c.h.b16 %v77
    %v151 = vunpack.c.l.b16 %v78
    %v152 = vunpack.c.h.b16 %v78
    %v153 = vunpack.c.l.b16 %v79
    %v154 = vunpack.c.h.b16 %v79
    %v155 = vunpack.c.l.b16 %v80
    %v156 = vunpack.c.h.b16 %v80
    %v157 = vunpack.c.l.b16 %v81
    %v158 = vunpack.c.h.b16 %v81
    %v159 = vunpack.c.l.b16 %v82
    %v160 = vunpack.c.h.b16 %v82
    %v161 = vunpack.c.l.b16 %v83
    %v162 = vunpack.c.h.b16 %v83
    %v163 = vunpack.c.l.b16 %v84
    %v164 = vunpack.c.h.b16 %v84
    %v165 = vunpack.c.l.b16 %v85
    %v166 = vunpack.c.h.b16 %v85
    %v167 = vunpack.c.l.b16 %v86
    %v168 = vunpack.c.h.b16 %v86
    %v169 = vunpack.c.l.b16 %v87
    %v170 = vunpack.c.h.b16 %v87
    %v171 = vunpack.c.l.b16 %v88
    %v172 = vunpack.c.h.b16 %v88
    %v173 = vunpack.c.l.b16 %v89
    %v174 = vunpack.c.h.b16 %v89
    %v175 = vunpack.c.l.b16 %v90
    %v176 = vunpack.c.h.b16 %v90
    %v177 = vunpack.c.l.b16 %v91
    %v178 = vunpack.c.h.b16 %v91
    %v179 = vunpack.c.l.b16 %v92
    %v180 = vunpack.c.h.b16 %v92
    %v181 = vunpack.c.l.b16 %v93
    %v182 = vunpack.c.h.b16 %v93
    %v183 = vunpack.c.l.b16 %v94
    %v184 = vunpack.c.h.b16 %v94
    %v185 = vunpack.c.l.b16 %v95
    %v186 = vunpack.c.h.b16 %v95
    %v187 = vunpack.c.l.b16 %v96
    %v188 = vunpack.c.h.b16 %v96
    %v189 = vunpack.c.l.b16 %v97
    %v190 = vunpack.c.h.b16 %v97
    %v191 = vunpack.c.l.b16 %v98
    %v192 = vunpack.c.h.b16 %v98
    %v193 = vunpack.c.l.b16 %v99
    %v194 = vunpack.c.h.b16 %v99
    %v195 = vunpack.c.l.b16 %v100
    %v196 = vunpack.c.h.b16 %v100
    %v197 = vpack.c.b16 %v137, %v133
    %v198 = vpack.c.b16 %v138, %v134
    %v199 = vpack.c.b16 %v139, %v135
    %v200 = vpack.c.b16 %v140, %v136
    %v201 = vpack.c.b16 %v145, %v141
    %v202 = vpack.c.b16 %v146, %v142
    %v203 = vpack.c.b16 %v147, %v143
    %v204 = vpack.c.b16 %v148, %v144
    %v205 = vpack.c.b16 %v153, %v149
    %v206 = vpack.c.b16 %v154, %v150
    %v207 = vpack.c.b16 %v155, %v151
    %v208 = vpack.c.b16 %v156, %v152
    %v209 = vpack.c.b16 %v161, %v157
    %v210 = vpack.c.b16 %v162, %v158
    %v211 = vpack.c.b16 %v163, %v159
    %v212 = vpack.c.b16 %v164, %v160
    %v213 = vpack.c.b16 %v169, %v165
    %v214 = vpack.c.b16 %v170, %v166
    %v215 = vpack.c.b16 %v171, %v167
    %v216 = vpack.c.b16 %v172, %v168
    %v217 = vpack.c.b16 %v177, %v173
    %v218 = vpack.c.b16 %v178, %v174
    %v219 = vpack.c.b16 %v179, %v175
    %v220 = vpack.c.b16 %v180, %v176
    %v221 = vpack.c.b16 %v185, %v181
    %v222 = vpack.c.b16 %v186, %v182
    %v223 = vpack.c.b16 %v187, %v183
    %v224 = vpack.c.b16 %v188, %v184
    %v225 = vpack.c.b16 %v193, %v189
    %v226 = vpack.c.b16 %v194, %v190
    %v227 = vpack.c.b16 %v195, %v191
    %v228 = vpack.c.b16 %v196, %v192
    %261 = vmatprep.subr.bf16.mxu0 %v226
    %262 = vmatpush1.bf16.msra.mxu0 %v225
    %263 = vmatprep.subr.bf16.mxu0 %v222
    %264 = vmatpush1.bf16.msra.mxu0 %v221
    %265 = vmatprep.subr.bf16.mxu0 %v218
    %266 = vmatpush1.bf16.msra.mxu0 %v217
    %267 = vmatprep.subr.bf16.mxu0 %v214
    %268 = vmatpush1.bf16.msra.mxu0 %v213
    %269 = vmatprep.subr.bf16.mxu0 %v210
    %270 = vmatpush1.bf16.msra.mxu0 %v209
    %271 = vmatprep.subr.bf16.mxu0 %v206
    %272 = vmatpush1.bf16.msra.mxu0 %v205
    %273 = vmatprep.subr.bf16.mxu0 %v202
    %274 = vmatpush1.bf16.msra.mxu0 %v201
    %275 = vmatprep.subr.bf16.mxu0 %v198
    %276 = vmatpush1.bf16.msra.mxu0 %v197
    %277 = vmatprep.subr.bf16.mxu0 0
    %278 = vmatpush2.bf16.msra.mxu0 0
    %279 = vmatprep.subr.bf16.mxu0 0
    %280 = vmatpush2.bf16.msra.mxu0 0
    %281 = vmatprep.subr.bf16.mxu0 0
    %282 = vmatpush2.bf16.msra.mxu0 0
    %283 = vmatprep.subr.bf16.mxu0 0
    %284 = vmatpush2.bf16.msra.mxu0 0
    %285 = vmatprep.subr.bf16.mxu0 0
    %286 = vmatpush2.bf16.msra.mxu0 0
    %287 = vmatprep.subr.bf16.mxu0 0
    %288 = vmatpush2.bf16.msra.mxu0 0
    %289 = vmatprep.subr.bf16.mxu0 0
    %290 = vmatpush2.bf16.msra.mxu0 0
    %291 = vmatprep.subr.bf16.mxu0 0
    %292 = vmatpush2.bf16.msra.mxu0 0
    %293 = vmatprep.mubr.bf16.mxu0 0
    %294 = vmatmul.mubr.bf16.gmra.mxu0 0
    %v295 = vpop.f32.mrf.mxu0
    %v296 = vadd.f32 0.0, %v295
    %v297 = vpop.f32.mrf.mxu0
    %v298 = vadd.f32 0.0, %v297
    %v299 = vpop.f32.mrf.mxu0
    %v300 = vpop.f32.mrf.mxu0
    %301 = vdwg.mxu0
    %302 = vmatprep.subr.bf16.mxu0 %v228
    %303 = vmatpush1.bf16.msra.mxu0 %v227
    %304 = vmatprep.subr.bf16.mxu0 %v224
    %305 = vmatpush1.bf16.msra.mxu0 %v223
    %306 = vmatprep.subr.bf16.mxu0 %v220
    %307 = vmatpush1.bf16.msra.mxu0 %v219
    %308 = vmatprep.subr.bf16.mxu0 %v216
    %309 = vmatpush1.bf16.msra.mxu0 %v215
    %310 = vmatprep.subr.bf16.mxu0 %v212
    %311 = vmatpush1.bf16.msra.mxu0 %v211
    %312 = vmatprep.subr.bf16.mxu0 %v208
    %313 = vmatpush1.bf16.msra.mxu0 %v207
    %314 = vmatprep.subr.bf16.mxu0 %v204
    %315 = vmatpush1.bf16.msra.mxu0 %v203
    %316 = vmatprep.subr.bf16.mxu0 %v200
    %317 = vmatpush1.bf16.msra.mxu0 %v199
    %318 = vmatprep.subr.bf16.mxu0 0
    %319 = vmatpush2.bf16.msra.mxu0 0
    %320 = vmatprep.subr.bf16.mxu0 0
    %321 = vmatpush2.bf16.msra.mxu0 0
    %322 = vmatprep.subr.bf16.mxu0 0
    %323 = vmatpush2.bf16.msra.mxu0 0
    %324 = vmatprep.subr.bf16.mxu0 0
    %325 = vmatpush2.bf16.msra.mxu0 0
    %326 = vmatprep.subr.bf16.mxu0 0
    %327 = vmatpush2.bf16.msra.mxu0 0
    %328 = vmatprep.subr.bf16.mxu0 0
    %329 = vmatpush2.bf16.msra.mxu0 0
    %330 = vmatprep.subr.bf16.mxu0 0
    %331 = vmatpush2.bf16.msra.mxu0 0
    %332 = vmatprep.subr.bf16.mxu0 0
    %333 = vmatpush2.bf16.msra.mxu0 0
    %334 = vmatprep.mubr.bf16.mxu0 0
    %335 = vmatmul.mubr.bf16.gmra.mxu0 0
    %v336 = vpop.f32.mrf.mxu0
    %v337 = vadd.f32 0.0, %v336
    %v338 = vpop.f32.mrf.mxu0
    %v339 = vadd.f32 0.0, %v338
    %v340 = vpop.f32.mrf.mxu0
    %v341 = vpop.f32.mrf.mxu0
    %342 = vdwg.mxu0
    %v345 = vunpack.c.l.b16 %v67
    %v346 = vunpack.c.l.b16 %v68
    %v347 = vrot.slane %v346, 7
    %vm348 = vcmask 1041409
    %v349 = vsel %vm348, %v347, %v345
    %v350 = vpack.c.b16 %v349, %v349
    %v355 = vunpack.c.l.b16 %v39
    %v356 = vunpack.c.h.b16 %v39
    %v357 = vunpack.c.l.b16 %v40
    %v358 = vunpack.c.h.b16 %v40
    %v359 = vunpack.c.l.b16 %v41
    %v360 = vunpack.c.h.b16 %v41
    %v361 = vunpack.c.l.b16 %v42
    %v362 = vunpack.c.h.b16 %v42
    %v363 = vpack.c.b16 %v359, %v355
    %v364 = vpack.c.b16 %v360, %v356
    %v365 = vpack.c.b16 %v361, %v357
    %v366 = vpack.c.b16 %v362, %v358
    %vm371 = vcmask 130048
    %v373 = vsel %vm371, %v350, 0
    %375 = vmatprep.subr.bf16.mxu0 0
    %376 = vmatpush1.bf16.msra.mxu0 0
    %377 = vmatprep.subr.bf16.mxu0 0
    %378 = vmatpush1.bf16.msra.mxu0 0
    %379 = vmatprep.subr.bf16.mxu0 0
    %380 = vmatpush1.bf16.msra.mxu0 0
    %381 = vmatprep.subr.bf16.mxu0 0
    %382 = vmatpush1.bf16.msra.mxu0 0
    %383 = vmatprep.subr.bf16.mxu0 0
    %384 = vmatpush1.bf16.msra.mxu0 0
    %385 = vmatprep.subr.bf16.mxu0 0
    %386 = vmatpush1.bf16.msra.mxu0 0
    %387 = vmatprep.subr.bf16.mxu0 0
    %388 = vmatpush1.bf16.msra.mxu0 0
    %389 = vmatprep.subr.bf16.mxu0 %v364
    %390 = vmatpush1.bf16.msra.mxu0 %v363
    %391 = vmatprep.subr.bf16.mxu0 0
    %392 = vmatpush2.bf16.msra.mxu0 0
    %393 = vmatprep.subr.bf16.mxu0 0
    %394 = vmatpush2.bf16.msra.mxu0 0
    %395 = vmatprep.subr.bf16.mxu0 0
    %396 = vmatpush2.bf16.msra.mxu0 0
    %397 = vmatprep.subr.bf16.mxu0 0
    %398 = vmatpush2.bf16.msra.mxu0 0
    %399 = vmatprep.subr.bf16.mxu0 0
    %400 = vmatpush2.bf16.msra.mxu0 0
    %401 = vmatprep.subr.bf16.mxu0 0
    %402 = vmatpush2.bf16.msra.mxu0 0
    %403 = vmatprep.subr.bf16.mxu0 0
    %404 = vmatpush2.bf16.msra.mxu0 0
    %405 = vmatprep.subr.bf16.mxu0 0
    %406 = vmatpush2.bf16.msra.mxu0 0
    %407 = vmatprep.mubr.bf16.mxu0 0
    %408 = vmatmul.mubr.bf16.gmra.mxu0 %v373
    %v409 = vpop.f32.mrf.mxu0
    %v410 = vadd.f32 %v296, %v409
    %v411 = vpop.f32.mrf.mxu0
    %v412 = vadd.f32 %v298, %v411
    %v413 = vpop.f32.mrf.mxu0
    %v414 = vpop.f32.mrf.mxu0
    %415 = vdwg.mxu0
    %416 = vmatprep.subr.bf16.mxu0 0
    %417 = vmatpush1.bf16.msra.mxu0 0
    %418 = vmatprep.subr.bf16.mxu0 0
    %419 = vmatpush1.bf16.msra.mxu0 0
    %420 = vmatprep.subr.bf16.mxu0 0
    %421 = vmatpush1.bf16.msra.mxu0 0
    %422 = vmatprep.subr.bf16.mxu0 0
    %423 = vmatpush1.bf16.msra.mxu0 0
    %424 = vmatprep.subr.bf16.mxu0 0
    %425 = vmatpush1.bf16.msra.mxu0 0
    %426 = vmatprep.subr.bf16.mxu0 0
    %427 = vmatpush1.bf16.msra.mxu0 0
    %428 = vmatprep.subr.bf16.mxu0 0
    %429 = vmatpush1.bf16.msra.mxu0 0
    %430 = vmatprep.subr.bf16.mxu0 %v366
    %431 = vmatpush1.bf16.msra.mxu0 %v365
    %432 = vmatprep.subr.bf16.mxu0 0
    %433 = vmatpush2.bf16.msra.mxu0 0
    %434 = vmatprep.subr.bf16.mxu0 0
    %435 = vmatpush2.bf16.msra.mxu0 0
    %436 = vmatprep.subr.bf16.mxu0 0
    %437 = vmatpush2.bf16.msra.mxu0 0
    %438 = vmatprep.subr.bf16.mxu0 0
    %439 = vmatpush2.bf16.msra.mxu0 0
    %440 = vmatprep.subr.bf16.mxu0 0
    %441 = vmatpush2.bf16.msra.mxu0 0
    %442 = vmatprep.subr.bf16.mxu0 0
    %443 = vmatpush2.bf16.msra.mxu0 0
    %444 = vmatprep.subr.bf16.mxu0 0
    %445 = vmatpush2.bf16.msra.mxu0 0
    %446 = vmatprep.subr.bf16.mxu0 0
    %447 = vmatpush2.bf16.msra.mxu0 0
    %448 = vmatprep.mubr.bf16.mxu0 0
    %449 = vmatmul.mubr.bf16.gmra.mxu0 %v373
    %v450 = vpop.f32.mrf.mxu0
    %v451 = vadd.f32 %v337, %v450
    %v452 = vpop.f32.mrf.mxu0
    %v453 = vadd.f32 %v339, %v452
    %v454 = vpop.f32.mrf.mxu0
    %v455 = vpop.f32.mrf.mxu0
    %456 = vdwg.mxu0
    %v457 = vadd.f32 %v410, %v48
    %v458 = vadd.f32 %v412, %v52
    %v459 = vadd.f32 %v451, %v56
    %v460 = vadd.f32 %v453, %v60
    %v461 = vxor.u32 %v457, 2147483648
    %v462 = vmul.f32 %v461, 1.442695
    %v463 = vpow.pop %v462
    %v464 = vadd.f32 %v463, 1.0
    %v465 = vrcp.pop %v464
    %v466 = vmul.f32 1.0, %v465
    %v467 = vxor.u32 %v458, 2147483648
    %v468 = vmul.f32 %v467, 1.442695
    %v469 = vpow.pop %v468
    %v470 = vadd.f32 %v469, 1.0
    %v471 = vrcp.pop %v470
    %v472 = vmul.f32 1.0, %v471
    %v473 = vtanh.pop %v459
    %v474 = vxor.u32 %v460, 2147483648
    %v475 = vmul.f32 %v474, 1.442695
    %v476 = vpow.pop %v475
    %v477 = vadd.f32 %v476, 1.0
    %v478 = vrcp.pop %v477
    %v479 = vmul.f32 1.0, %v478
    %v480 = vmul.f32 %v472, 0.0
    %v481 = vmul.f32 %v466, %v473
    %v482 = vadd.f32 %v480, %v481
    %v483 = vtanh.pop %v482
    %v484 = vmul.f32 %v479, %v483
    %v485 = vld [vmem:[%s0 + $0x1] sm:$0x1]
    %v486 = vld [vmem:[%s0 + $0x9] sm:$0x1]
    %v487 = vpack.c.bf16 %v485, %v485
    %v488 = vpack.c.bf16 %v486, %v486
    %v489 = vpack.c.bf16 %v484, %v484
    %490 = vmatprep.subr.bf16.mxu0 %v226
    %491 = vmatpush1.bf16.msra.mxu0 %v225
    %492 = vmatprep.subr.bf16.mxu0 %v222
    %493 = vmatpush1.bf16.msra.mxu0 %v221
    %494 = vmatprep.subr.bf16.mxu0 %v218
    %495 = vmatpush1.bf16.msra.mxu0 %v217
    %496 = vmatprep.subr.bf16.mxu0 %v214
    %497 = vmatpush1.bf16.msra.mxu0 %v213
    %498 = vmatprep.subr.bf16.mxu0 %v210
    %499 = vmatpush1.bf16.msra.mxu0 %v209
    %500 = vmatprep.subr.bf16.mxu0 %v206
    %501 = vmatpush1.bf16.msra.mxu0 %v205
    %502 = vmatprep.subr.bf16.mxu0 %v202
    %503 = vmatpush1.bf16.msra.mxu0 %v201
    %504 = vmatprep.subr.bf16.mxu0 %v198
    %505 = vmatpush1.bf16.msra.mxu0 %v197
    %506 = vmatprep.subr.bf16.mxu0 0
    %507 = vmatpush2.bf16.msra.mxu0 0
    %508 = vmatprep.subr.bf16.mxu0 0
    %509 = vmatpush2.bf16.msra.mxu0 0
    %510 = vmatprep.subr.bf16.mxu0 0
    %511 = vmatpush2.bf16.msra.mxu0 0
    %512 = vmatprep.subr.bf16.mxu0 0
    %513 = vmatpush2.bf16.msra.mxu0 0
    %514 = vmatprep.subr.bf16.mxu0 0
    %515 = vmatpush2.bf16.msra.mxu0 0
    %516 = vmatprep.subr.bf16.mxu0 0
    %517 = vmatpush2.bf16.msra.mxu0 0
    %518 = vmatprep.subr.bf16.mxu0 0
    %519 = vmatpush2.bf16.msra.mxu0 0
    %520 = vmatprep.subr.bf16.mxu0 0
    %521 = vmatpush2.bf16.msra.mxu0 0
    %522 = vmatprep.mubr.bf16.mxu0 0
    %523 = vmatmul.mubr.bf16.gmra.mxu0 %v489
    %v524 = vpop.f32.mrf.mxu0
    %v525 = vadd.f32 0.0, %v524
    %v526 = vpop.f32.mrf.mxu0
    %v527 = vadd.f32 0.0, %v526
    %v528 = vpop.f32.mrf.mxu0
    %v529 = vpop.f32.mrf.mxu0
    %530 = vdwg.mxu0
    %531 = vmatprep.subr.bf16.mxu0 %v228
    %532 = vmatpush1.bf16.msra.mxu0 %v227
    %533 = vmatprep.subr.bf16.mxu0 %v224
    %534 = vmatpush1.bf16.msra.mxu0 %v223
    %535 = vmatprep.subr.bf16.mxu0 %v220
    %536 = vmatpush1.bf16.msra.mxu0 %v219
    %537 = vmatprep.subr.bf16.mxu0 %v216
    %538 = vmatpush1.bf16.msra.mxu0 %v215
    %539 = vmatprep.subr.bf16.mxu0 %v212
    %540 = vmatpush1.bf16.msra.mxu0 %v211
    %541 = vmatprep.subr.bf16.mxu0 %v208
    %542 = vmatpush1.bf16.msra.mxu0 %v207
    %543 = vmatprep.subr.bf16.mxu0 %v204
    %544 = vmatpush1.bf16.msra.mxu0 %v203
    %545 = vmatprep.subr.bf16.mxu0 %v200
    %546 = vmatpush1.bf16.msra.mxu0 %v199
    %547 = vmatprep.subr.bf16.mxu0 0
    %548 = vmatpush2.bf16.msra.mxu0 0
    %549 = vmatprep.subr.bf16.mxu0 0
    %550 = vmatpush2.bf16.msra.mxu0 0
    %551 = vmatprep.subr.bf16.mxu0 0
    %552 = vmatpush2.bf16.msra.mxu0 0
    %553 = vmatprep.subr.bf16.mxu0 0
    %554 = vmatpush2.bf16.msra.mxu0 0
    %555 = vmatprep.subr.bf16.mxu0 0
    %556 = vmatpush2.bf16.msra.mxu0 0
    %557 = vmatprep.subr.bf16.mxu0 0
    %558 = vmatpush2.bf16.msra.mxu0 0
    %559 = vmatprep.subr.bf16.mxu0 0
    %560 = vmatpush2.bf16.msra.mxu0 0
    %561 = vmatprep.subr.bf16.mxu0 0
    %562 = vmatpush2.bf16.msra.mxu0 0
    %563 = vmatprep.mubr.bf16.mxu0 0
    %564 = vmatmul.mubr.bf16.gmra.mxu0 %v489
    %v565 = vpop.f32.mrf.mxu0
    %v566 = vadd.f32 0.0, %v565
    %v567 = vpop.f32.mrf.mxu0
    %v568 = vadd.f32 0.0, %v567
    %v569 = vpop.f32.mrf.mxu0
    %v570 = vpop.f32.mrf.mxu0
    %571 = vdwg.mxu0
    %v574 = vunpack.c.l.b16 %v487
    %v575 = vunpack.c.l.b16 %v488
    %v576 = vrot.slane %v575, 7
    %v577 = vsel %vm348, %v576, %v574
    %v578 = vpack.c.b16 %v577, %v577
    %v580 = vsel %vm371, %v578, 0
    %582 = vmatprep.subr.bf16.mxu0 0
    %583 = vmatpush1.bf16.msra.mxu0 0
    %584 = vmatprep.subr.bf16.mxu0 0
    %585 = vmatpush1.bf16.msra.mxu0 0
    %586 = vmatprep.subr.bf16.mxu0 0
    %587 = vmatpush1.bf16.msra.mxu0 0
    %588 = vmatprep.subr.bf16.mxu0 0
    %589 = vmatpush1.bf16.msra.mxu0 0
    %590 = vmatprep.subr.bf16.mxu0 0
    %591 = vmatpush1.bf16.msra.mxu0 0
    %592 = vmatprep.subr.bf16.mxu0 0
    %593 = vmatpush1.bf16.msra.mxu0 0
    %594 = vmatprep.subr.bf16.mxu0 0
    %595 = vmatpush1.bf16.msra.mxu0 0
    %596 = vmatprep.subr.bf16.mxu0 %v364
    %597 = vmatpush1.bf16.msra.mxu0 %v363
    %598 = vmatprep.subr.bf16.mxu0 0
    %599 = vmatpush2.bf16.msra.mxu0 0
    %600 = vmatprep.subr.bf16.mxu0 0
    %601 = vmatpush2.bf16.msra.mxu0 0
    %602 = vmatprep.subr.bf16.mxu0 0
    %603 = vmatpush2.bf16.msra.mxu0 0
    %604 = vmatprep.subr.bf16.mxu0 0
    %605 = vmatpush2.bf16.msra.mxu0 0
    %606 = vmatprep.subr.bf16.mxu0 0
    %607 = vmatpush2.bf16.msra.mxu0 0
    %608 = vmatprep.subr.bf16.mxu0 0
    %609 = vmatpush2.bf16.msra.mxu0 0
    %610 = vmatprep.subr.bf16.mxu0 0
    %611 = vmatpush2.bf16.msra.mxu0 0
    %612 = vmatprep.subr.bf16.mxu0 0
    %613 = vmatpush2.bf16.msra.mxu0 0
    %614 = vmatprep.mubr.bf16.mxu0 0
    %615 = vmatmul.mubr.bf16.gmra.mxu0 %v580
    %v616 = vpop.f32.mrf.mxu0
    %v617 = vadd.f32 %v525, %v616
    %v618 = vpop.f32.mrf.mxu0
    %v619 = vadd.f32 %v527, %v618
    %v620 = vpop.f32.mrf.mxu0
    %v621 = vpop.f32.mrf.mxu0
    %622 = vdwg.mxu0
    %623 = vmatprep.subr.bf16.mxu0 0
    %624 = vmatpush1.bf16.msra.mxu0 0
    %625 = vmatprep.subr.bf16.mxu0 0
    %626 = vmatpush1.bf16.msra.mxu0 0
    %627 = vmatprep.subr.bf16.mxu0 0
    %628 = vmatpush1.bf16.msra.mxu0 0
    %629 = vmatprep.subr.bf16.mxu0 0
    %630 = vmatpush1.bf16.msra.mxu0 0
    %631 = vmatprep.subr.bf16.mxu0 0
    %632 = vmatpush1.bf16.msra.mxu0 0
    %633 = vmatprep.subr.bf16.mxu0 0
    %634 = vmatpush1.bf16.msra.mxu0 0
    %635 = vmatprep.subr.bf16.mxu0 0
    %636 = vmatpush1.bf16.msra.mxu0 0
    %637 = vmatprep.subr.bf16.mxu0 %v366
    %638 = vmatpush1.bf16.msra.mxu0 %v365
    %639 = vmatprep.subr.bf16.mxu0 0
    %640 = vmatpush2.bf16.msra.mxu0 0
    %641 = vmatprep.subr.bf16.mxu0 0
    %642 = vmatpush2.bf16.msra.mxu0 0
    %643 = vmatprep.subr.bf16.mxu0 0
    %644 = vmatpush2.bf16.msra.mxu0 0
    %645 = vmatprep.subr.bf16.mxu0 0
    %646 = vmatpush2.bf16.msra.mxu0 0
    %647 = vmatprep.subr.bf16.mxu0 0
    %648 = vmatpush2.bf16.msra.mxu0 0
    %649 = vmatprep.subr.bf16.mxu0 0
    %650 = vmatpush2.bf16.msra.mxu0 0
    %651 = vmatprep.subr.bf16.mxu0 0
    %652 = vmatpush2.bf16.msra.mxu0 0
    %653 = vmatprep.subr.bf16.mxu0 0
    %654 = vmatpush2.bf16.msra.mxu0 0
    %655 = vmatprep.mubr.bf16.mxu0 0
    %656 = vmatmul.mubr.bf16.gmra.mxu0 %v580
    %v657 = vpop.f32.mrf.mxu0
    %v658 = vadd.f32 %v566, %v657
    %v659 = vpop.f32.mrf.mxu0
    %v660 = vadd.f32 %v568, %v659
    %v661 = vpop.f32.mrf.mxu0
    %v662 = vpop.f32.mrf.mxu0
    %663 = vdwg.mxu0
    %v664 = vadd.f32 %v617, %v48
    %v665 = vadd.f32 %v619, %v52
    %v666 = vadd.f32 %v658, %v56
    %v667 = vadd.f32 %v660, %v60
    %v668 = vxor.u32 %v664, 2147483648
    %v669 = vmul.f32 %v668, 1.442695
    %v670 = vpow.pop %v669
    %v671 = vadd.f32 %v670, 1.0
    %v672 = vrcp.pop %v671
    %v673 = vmul.f32 1.0, %v672
    %v674 = vxor.u32 %v665, 2147483648
    %v675 = vmul.f32 %v674, 1.442695
    %v676 = vpow.pop %v675
    %v677 = vadd.f32 %v676, 1.0
    %v678 = vrcp.pop %v677
    %v679 = vmul.f32 1.0, %v678
    %v680 = vtanh.pop %v666
    %v681 = vxor.u32 %v667, 2147483648
    %v682 = vmul.f32 %v681, 1.442695
    %v683 = vpow.pop %v682
    %v684 = vadd.f32 %v683, 1.0
    %v685 = vrcp.pop %v684
    %v686 = vmul.f32 1.0, %v685
    %v687 = vmul.f32 %v679, %v482
    %v688 = vmul.f32 %v673, %v680
    %v689 = vadd.f32 %v687, %v688
    %v690 = vtanh.pop %v689
    %v691 = vmul.f32 %v686, %v690
    %v692 = vld [vmem:[%s0 + $0x2] sm:$0x1]
    %v693 = vld [vmem:[%s0 + $0xa] sm:$0x1]
    %v694 = vpack.c.bf16 %v692, %v692
    %v695 = vpack.c.bf16 %v693, %v693
    %v696 = vpack.c.bf16 %v691, %v691
    %697 = vmatprep.subr.bf16.mxu0 %v226
    %698 = vmatpush1.bf16.msra.mxu0 %v225
    %699 = vmatprep.subr.bf16.mxu0 %v222
    %700 = vmatpush1.bf16.msra.mxu0 %v221
    %701 = vmatprep.subr.bf16.mxu0 %v218
    %702 = vmatpush1.bf16.msra.mxu0 %v217
    %703 = vmatprep.subr.bf16.mxu0 %v214
    %704 = vmatpush1.bf16.msra.mxu0 %v213
    %705 = vmatprep.subr.bf16.mxu0 %v210
    %706 = vmatpush1.bf16.msra.mxu0 %v209
    %707 = vmatprep.subr.bf16.mxu0 %v206
    %708 = vmatpush1.bf16.msra.mxu0 %v205
    %709 = vmatprep.subr.bf16.mxu0 %v202
    %710 = vmatpush1.bf16.msra.mxu0 %v201
    %711 = vmatprep.subr.bf16.mxu0 %v198
    %712 = vmatpush1.bf16.msra.mxu0 %v197
    %713 = vmatprep.subr.bf16.mxu0 0
    %714 = vmatpush2.bf16.msra.mxu0 0
    %715 = vmatprep.subr.bf16.mxu0 0
    %716 = vmatpush2.bf16.msra.mxu0 0
    %717 = vmatprep.subr.bf16.mxu0 0
    %718 = vmatpush2.bf16.msra.mxu0 0
    %719 = vmatprep.subr.bf16.mxu0 0
    %720 = vmatpush2.bf16.msra.mxu0 0
    %721 = vmatprep.subr.bf16.mxu0 0
    %722 = vmatpush2.bf16.msra.mxu0 0
    %723 = vmatprep.subr.bf16.mxu0 0
    %724 = vmatpush2.bf16.msra.mxu0 0
    %725 = vmatprep.subr.bf16.mxu0 0
    %726 = vmatpush2.bf16.msra.mxu0 0
    %727 = vmatprep.subr.bf16.mxu0 0
    %728 = vmatpush2.bf16.msra.mxu0 0
    %729 = vmatprep.mubr.bf16.mxu0 0
    %730 = vmatmul.mubr.bf16.gmra.mxu0 %v696
    %v731 = vpop.f32.mrf.mxu0
    %v732 = vadd.f32 0.0, %v731
    %v733 = vpop.f32.mrf.mxu0
    %v734 = vadd.f32 0.0, %v733
    %v735 = vpop.f32.mrf.mxu0
    %v736 = vpop.f32.mrf.mxu0
    %737 = vdwg.mxu0
    %738 = vmatprep.subr.bf16.mxu0 %v228
    %739 = vmatpush1.bf16.msra.mxu0 %v227
    %740 = vmatprep.subr.bf16.mxu0 %v224
    %741 = vmatpush1.bf16.msra.mxu0 %v223
    %742 = vmatprep.subr.bf16.mxu0 %v220
    %743 = vmatpush1.bf16.msra.mxu0 %v219
    %744 = vmatprep.subr.bf16.mxu0 %v216
    %745 = vmatpush1.bf16.msra.mxu0 %v215
    %746 = vmatprep.subr.bf16.mxu0 %v212
    %747 = vmatpush1.bf16.msra.mxu0 %v211
    %748 = vmatprep.subr.bf16.mxu0 %v208
    %749 = vmatpush1.bf16.msra.mxu0 %v207
    %750 = vmatprep.subr.bf16.mxu0 %v204
    %751 = vmatpush1.bf16.msra.mxu0 %v203
    %752 = vmatprep.subr.bf16.mxu0 %v200
    %753 = vmatpush1.bf16.msra.mxu0 %v199
    %754 = vmatprep.subr.bf16.mxu0 0
    %755 = vmatpush2.bf16.msra.mxu0 0
    %756 = vmatprep.subr.bf16.mxu0 0
    %757 = vmatpush2.bf16.msra.mxu0 0
    %758 = vmatprep.subr.bf16.mxu0 0
    %759 = vmatpush2.bf16.msra.mxu0 0
    %760 = vmatprep.subr.bf16.mxu0 0
    %761 = vmatpush2.bf16.msra.mxu0 0
    %762 = vmatprep.subr.bf16.mxu0 0
    %763 = vmatpush2.bf16.msra.mxu0 0
    %764 = vmatprep.subr.bf16.mxu0 0
    %765 = vmatpush2.bf16.msra.mxu0 0
    %766 = vmatprep.subr.bf16.mxu0 0
    %767 = vmatpush2.bf16.msra.mxu0 0
    %768 = vmatprep.subr.bf16.mxu0 0
    %769 = vmatpush2.bf16.msra.mxu0 0
    %770 = vmatprep.mubr.bf16.mxu0 0
    %771 = vmatmul.mubr.bf16.gmra.mxu0 %v696
    %v772 = vpop.f32.mrf.mxu0
    %v773 = vadd.f32 0.0, %v772
    %v774 = vpop.f32.mrf.mxu0
    %v775 = vadd.f32 0.0, %v774
    %v776 = vpop.f32.mrf.mxu0
    %v777 = vpop.f32.mrf.mxu0
    %778 = vdwg.mxu0
    %v781 = vunpack.c.l.b16 %v694
    %v782 = vunpack.c.l.b16 %v695
    %v783 = vrot.slane %v782, 7
    %v784 = vsel %vm348, %v783, %v781
    %v785 = vpack.c.b16 %v784, %v784
    %v787 = vsel %vm371, %v785, 0
    %789 = vmatprep.subr.bf16.mxu0 0
    %790 = vmatpush1.bf16.msra.mxu0 0
    %791 = vmatprep.subr.bf16.mxu0 0
    %792 = vmatpush1.bf16.msra.mxu0 0
    %793 = vmatprep.subr.bf16.mxu0 0
    %794 = vmatpush1.bf16.msra.mxu0 0
    %795 = vmatprep.subr.bf16.mxu0 0
    %796 = vmatpush1.bf16.msra.mxu0 0
    %797 = vmatprep.subr.bf16.mxu0 0
    %798 = vmatpush1.bf16.msra.mxu0 0
    %799 = vmatprep.subr.bf16.mxu0 0
    %800 = vmatpush1.bf16.msra.mxu0 0
    %801 = vmatprep.subr.bf16.mxu0 0
    %802 = vmatpush1.bf16.msra.mxu0 0
    %803 = vmatprep.subr.bf16.mxu0 %v364
    %804 = vmatpush1.bf16.msra.mxu0 %v363
    %805 = vmatprep.subr.bf16.mxu0 0
    %806 = vmatpush2.bf16.msra.mxu0 0
    %807 = vmatprep.subr.bf16.mxu0 0
    %808 = vmatpush2.bf16.msra.mxu0 0
    %809 = vmatprep.subr.bf16.mxu0 0
    %810 = vmatpush2.bf16.msra.mxu0 0
    %811 = vmatprep.subr.bf16.mxu0 0
    %812 = vmatpush2.bf16.msra.mxu0 0
    %813 = vmatprep.subr.bf16.mxu0 0
    %814 = vmatpush2.bf16.msra.mxu0 0
    %815 = vmatprep.subr.bf16.mxu0 0
    %816 = vmatpush2.bf16.msra.mxu0 0
    %817 = vmatprep.subr.bf16.mxu0 0
    %818 = vmatpush2.bf16.msra.mxu0 0
    %819 = vmatprep.subr.bf16.mxu0 0
    %820 = vmatpush2.bf16.msra.mxu0 0
    %821 = vmatprep.mubr.bf16.mxu0 0
    %822 = vmatmul.mubr.bf16.gmra.mxu0 %v787
    %v823 = vpop.f32.mrf.mxu0
    %v824 = vadd.f32 %v732, %v823
    %v825 = vpop.f32.mrf.mxu0
    %v826 = vadd.f32 %v734, %v825
    %v827 = vpop.f32.mrf.mxu0
    %v828 = vpop.f32.mrf.mxu0
    %829 = vdwg.mxu0
    %830 = vmatprep.subr.bf16.mxu0 0
    %831 = vmatpush1.bf16.msra.mxu0 0
    %832 = vmatprep.subr.bf16.mxu0 0
    %833 = vmatpush1.bf16.msra.mxu0 0
    %834 = vmatprep.subr.bf16.mxu0 0
    %835 = vmatpush1.bf16.msra.mxu0 0
    %836 = vmatprep.subr.bf16.mxu0 0
    %837 = vmatpush1.bf16.msra.mxu0 0
    %838 = vmatprep.subr.bf16.mxu0 0
    %839 = vmatpush1.bf16.msra.mxu0 0
    %840 = vmatprep.subr.bf16.mxu0 0
    %841 = vmatpush1.bf16.msra.mxu0 0
    %842 = vmatprep.subr.bf16.mxu0 0
    %843 = vmatpush1.bf16.msra.mxu0 0
    %844 = vmatprep.subr.bf16.mxu0 %v366
    %845 = vmatpush1.bf16.msra.mxu0 %v365
    %846 = vmatprep.subr.bf16.mxu0 0
    %847 = vmatpush2.bf16.msra.mxu0 0
    %848 = vmatprep.subr.bf16.mxu0 0
    %849 = vmatpush2.bf16.msra.mxu0 0
    %850 = vmatprep.subr.bf16.mxu0 0
    %851 = vmatpush2.bf16.msra.mxu0 0
    %852 = vmatprep.subr.bf16.mxu0 0
    %853 = vmatpush2.bf16.msra.mxu0 0
    %854 = vmatprep.subr.bf16.mxu0 0
    %855 = vmatpush2.bf16.msra.mxu0 0
    %856 = vmatprep.subr.bf16.mxu0 0
    %857 = vmatpush2.bf16.msra.mxu0 0
    %858 = vmatprep.subr.bf16.mxu0 0
    %859 = vmatpush2.bf16.msra.mxu0 0
    %860 = vmatprep.subr.bf16.mxu0 0
    %861 = vmatpush2.bf16.msra.mxu0 0
    %862 = vmatprep.mubr.bf16.mxu0 0
    %863 = vmatmul.mubr.bf16.gmra.mxu0 %v787
    %v864 = vpop.f32.mrf.mxu0
    %v865 = vadd.f32 %v773, %v864
    %v866 = vpop.f32.mrf.mxu0
    %v867 = vadd.f32 %v775, %v866
    %v868 = vpop.f32.mrf.mxu0
    %v869 = vpop.f32.mrf.mxu0
    %870 = vdwg.mxu0
    %v871 = vadd.f32 %v824, %v48
    %v872 = vadd.f32 %v826, %v52
    %v873 = vadd.f32 %v865, %v56
    %v874 = vadd.f32 %v867, %v60
    %v875 = vxor.u32 %v871, 2147483648
    %v876 = vmul.f32 %v875, 1.442695
    %v877 = vpow.pop %v876
    %v878 = vadd.f32 %v877, 1.0
    %v879 = vrcp.pop %v878
    %v880 = vmul.f32 1.0, %v879
    %v881 = vxor.u32 %v872, 2147483648
    %v882 = vmul.f32 %v881, 1.442695
    %v883 = vpow.pop %v882
    %v884 = vadd.f32 %v883, 1.0
    %v885 = vrcp.pop %v884
    %v886 = vmul.f32 1.0, %v885
    %v887 = vtanh.pop %v873
    %v888 = vxor.u32 %v874, 2147483648
    %v889 = vmul.f32 %v888, 1.442695
    %v890 = vpow.pop %v889
    %v891 = vadd.f32 %v890, 1.0
    %v892 = vrcp.pop %v891
    %v893 = vmul.f32 1.0, %v892
    %v894 = vmul.f32 %v886, %v689
    %v895 = vmul.f32 %v880, %v887
    %v896 = vadd.f32 %v894, %v895
    %v897 = vtanh.pop %v896
    %v898 = vmul.f32 %v893, %v897
    %v899 = vld [vmem:[%s0 + $0x3] sm:$0x1]
    %v900 = vld [vmem:[%s0 + $0xb] sm:$0x1]
    %v901 = vpack.c.bf16 %v899, %v899
    %v902 = vpack.c.bf16 %v900, %v900
    %v903 = vpack.c.bf16 %v898, %v898
    %904 = vmatprep.subr.bf16.mxu0 %v226
    %905 = vmatpush1.bf16.msra.mxu0 %v225
    %906 = vmatprep.subr.bf16.mxu0 %v222
    %907 = vmatpush1.bf16.msra.mxu0 %v221
    %908 = vmatprep.subr.bf16.mxu0 %v218
    %909 = vmatpush1.bf16.msra.mxu0 %v217
    %910 = vmatprep.subr.bf16.mxu0 %v214
    %911 = vmatpush1.bf16.msra.mxu0 %v213
    %912 = vmatprep.subr.bf16.mxu0 %v210
    %913 = vmatpush1.bf16.msra.mxu0 %v209
    %914 = vmatprep.subr.bf16.mxu0 %v206
    %915 = vmatpush1.bf16.msra.mxu0 %v205
    %916 = vmatprep.subr.bf16.mxu0 %v202
    %917 = vmatpush1.bf16.msra.mxu0 %v201
    %918 = vmatprep.subr.bf16.mxu0 %v198
    %919 = vmatpush1.bf16.msra.mxu0 %v197
    %920 = vmatprep.subr.bf16.mxu0 0
    %921 = vmatpush2.bf16.msra.mxu0 0
    %922 = vmatprep.subr.bf16.mxu0 0
    %923 = vmatpush2.bf16.msra.mxu0 0
    %924 = vmatprep.subr.bf16.mxu0 0
    %925 = vmatpush2.bf16.msra.mxu0 0
    %926 = vmatprep.subr.bf16.mxu0 0
    %927 = vmatpush2.bf16.msra.mxu0 0
    %928 = vmatprep.subr.bf16.mxu0 0
    %929 = vmatpush2.bf16.msra.mxu0 0
    %930 = vmatprep.subr.bf16.mxu0 0
    %931 = vmatpush2.bf16.msra.mxu0 0
    %932 = vmatprep.subr.bf16.mxu0 0
    %933 = vmatpush2.bf16.msra.mxu0 0
    %934 = vmatprep.subr.bf16.mxu0 0
    %935 = vmatpush2.bf16.msra.mxu0 0
    %936 = vmatprep.mubr.bf16.mxu0 0
    %937 = vmatmul.mubr.bf16.gmra.mxu0 %v903
    %v938 = vpop.f32.mrf.mxu0
    %v939 = vadd.f32 0.0, %v938
    %v940 = vpop.f32.mrf.mxu0
    %v941 = vadd.f32 0.0, %v940
    %v942 = vpop.f32.mrf.mxu0
    %v943 = vpop.f32.mrf.mxu0
    %944 = vdwg.mxu0
    %945 = vmatprep.subr.bf16.mxu0 %v228
    %946 = vmatpush1.bf16.msra.mxu0 %v227
    %947 = vmatprep.subr.bf16.mxu0 %v224
    %948 = vmatpush1.bf16.msra.mxu0 %v223
    %949 = vmatprep.subr.bf16.mxu0 %v220
    %950 = vmatpush1.bf16.msra.mxu0 %v219
    %951 = vmatprep.subr.bf16.mxu0 %v216
    %952 = vmatpush1.bf16.msra.mxu0 %v215
    %953 = vmatprep.subr.bf16.mxu0 %v212
    %954 = vmatpush1.bf16.msra.mxu0 %v211
    %955 = vmatprep.subr.bf16.mxu0 %v208
    %956 = vmatpush1.bf16.msra.mxu0 %v207
    %957 = vmatprep.subr.bf16.mxu0 %v204
    %958 = vmatpush1.bf16.msra.mxu0 %v203
    %959 = vmatprep.subr.bf16.mxu0 %v200
    %960 = vmatpush1.bf16.msra.mxu0 %v199
    %961 = vmatprep.subr.bf16.mxu0 0
    %962 = vmatpush2.bf16.msra.mxu0 0
    %963 = vmatprep.subr.bf16.mxu0 0
    %964 = vmatpush2.bf16.msra.mxu0 0
    %965 = vmatprep.subr.bf16.mxu0 0
    %966 = vmatpush2.bf16.msra.mxu0 0
    %967 = vmatprep.subr.bf16.mxu0 0
    %968 = vmatpush2.bf16.msra.mxu0 0
    %969 = vmatprep.subr.bf16.mxu0 0
    %970 = vmatpush2.bf16.msra.mxu0 0
    %971 = vmatprep.subr.bf16.mxu0 0
    %972 = vmatpush2.bf16.msra.mxu0 0
    %973 = vmatprep.subr.bf16.mxu0 0
    %974 = vmatpush2.bf16.msra.mxu0 0
    %975 = vmatprep.subr.bf16.mxu0 0
    %976 = vmatpush2.bf16.msra.mxu0 0
    %977 = vmatprep.mubr.bf16.mxu0 0
    %978 = vmatmul.mubr.bf16.gmra.mxu0 %v903
    %v979 = vpop.f32.mrf.mxu0
    %v980 = vadd.f32 0.0, %v979
    %v981 = vpop.f32.mrf.mxu0
    %v982 = vadd.f32 0.0, %v981
    %v983 = vpop.f32.mrf.mxu0
    %v984 = vpop.f32.mrf.mxu0
    %985 = vdwg.mxu0
    %v988 = vunpack.c.l.b16 %v901
    %v989 = vunpack.c.l.b16 %v902
    %v990 = vrot.slane %v989, 7
    %v991 = vsel %vm348, %v990, %v988
    %v992 = vpack.c.b16 %v991, %v991
    %v994 = vsel %vm371, %v992, 0
    %996 = vmatprep.subr.bf16.mxu0 0
    %997 = vmatpush1.bf16.msra.mxu0 0
    %998 = vmatprep.subr.bf16.mxu0 0
    %999 = vmatpush1.bf16.msra.mxu0 0
    %1000 = vmatprep.subr.bf16.mxu0 0
    %1001 = vmatpush1.bf16.msra.mxu0 0
    %1002 = vmatprep.subr.bf16.mxu0 0
    %1003 = vmatpush1.bf16.msra.mxu0 0
    %1004 = vmatprep.subr.bf16.mxu0 0
    %1005 = vmatpush1.bf16.msra.mxu0 0
    %1006 = vmatprep.subr.bf16.mxu0 0
    %1007 = vmatpush1.bf16.msra.mxu0 0
    %1008 = vmatprep.subr.bf16.mxu0 0
    %1009 = vmatpush1.bf16.msra.mxu0 0
    %1010 = vmatprep.subr.bf16.mxu0 %v364
    %1011 = vmatpush1.bf16.msra.mxu0 %v363
    %1012 = vmatprep.subr.bf16.mxu0 0
    %1013 = vmatpush2.bf16.msra.mxu0 0
    %1014 = vmatprep.subr.bf16.mxu0 0
    %1015 = vmatpush2.bf16.msra.mxu0 0
    %1016 = vmatprep.subr.bf16.mxu0 0
    %1017 = vmatpush2.bf16.msra.mxu0 0
    %1018 = vmatprep.subr.bf16.mxu0 0
    %1019 = vmatpush2.bf16.msra.mxu0 0
    %1020 = vmatprep.subr.bf16.mxu0 0
    %1021 = vmatpush2.bf16.msra.mxu0 0
    %1022 = vmatprep.subr.bf16.mxu0 0
    %1023 = vmatpush2.bf16.msra.mxu0 0
    %1024 = vmatprep.subr.bf16.mxu0 0
    %1025 = vmatpush2.bf16.msra.mxu0 0
    %1026 = vmatprep.subr.bf16.mxu0 0
    %1027 = vmatpush2.bf16.msra.mxu0 0
    %1028 = vmatprep.mubr.bf16.mxu0 0
    %1029 = vmatmul.mubr.bf16.gmra.mxu0 %v994
    %v1030 = vpop.f32.mrf.mxu0
    %v1031 = vadd.f32 %v939, %v1030
    %v1032 = vpop.f32.mrf.mxu0
    %v1033 = vadd.f32 %v941, %v1032
    %v1034 = vpop.f32.mrf.mxu0
    %v1035 = vpop.f32.mrf.mxu0
    %1036 = vdwg.mxu0
    %1037 = vmatprep.subr.bf16.mxu0 0
    %1038 = vmatpush1.bf16.msra.mxu0 0
    %1039 = vmatprep.subr.bf16.mxu0 0
    %1040 = vmatpush1.bf16.msra.mxu0 0
    %1041 = vmatprep.subr.bf16.mxu0 0
    %1042 = vmatpush1.bf16.msra.mxu0 0
    %1043 = vmatprep.subr.bf16.mxu0 0
    %1044 = vmatpush1.bf16.msra.mxu0 0
    %1045 = vmatprep.subr.bf16.mxu0 0
    %1046 = vmatpush1.bf16.msra.mxu0 0
    %1047 = vmatprep.subr.bf16.mxu0 0
    %1048 = vmatpush1.bf16.msra.mxu0 0
    %1049 = vmatprep.subr.bf16.mxu0 0
    %1050 = vmatpush1.bf16.msra.mxu0 0
    %1051 = vmatprep.subr.bf16.mxu0 %v366
    %1052 = vmatpush1.bf16.msra.mxu0 %v365
    %1053 = vmatprep.subr.bf16.mxu0 0
    %1054 = vmatpush2.bf16.msra.mxu0 0
    %1055 = vmatprep.subr.bf16.mxu0 0
    %1056 = vmatpush2.bf16.msra.mxu0 0
    %1057 = vmatprep.subr.bf16.mxu0 0
    %1058 = vmatpush2.bf16.msra.mxu0 0
    %1059 = vmatprep.subr.bf16.mxu0 0
    %1060 = vmatpush2.bf16.msra.mxu0 0
    %1061 = vmatprep.subr.bf16.mxu0 0
    %1062 = vmatpush2.bf16.msra.mxu0 0
    %1063 = vmatprep.subr.bf16.mxu0 0
    %1064 = vmatpush2.bf16.msra.mxu0 0
    %1065 = vmatprep.subr.bf16.mxu0 0
    %1066 = vmatpush2.bf16.msra.mxu0 0
    %1067 = vmatprep.subr.bf16.mxu0 0
    %1068 = vmatpush2.bf16.msra.mxu0 0
    %1069 = vmatprep.mubr.bf16.mxu0 0
    %1070 = vmatmul.mubr.bf16.gmra.mxu0 %v994
    %v1071 = vpop.f32.mrf.mxu0
    %v1072 = vadd.f32 %v980, %v1071
    %v1073 = vpop.f32.mrf.mxu0
    %v1074 = vadd.f32 %v982, %v1073
    %v1075 = vpop.f32.mrf.mxu0
    %v1076 = vpop.f32.mrf.mxu0
    %1077 = vdwg.mxu0
    %v1078 = vadd.f32 %v1031, %v48
    %v1079 = vadd.f32 %v1033, %v52
    %v1080 = vadd.f32 %v1072, %v56
    %v1081 = vadd.f32 %v1074, %v60
    %v1082 = vxor.u32 %v1078, 2147483648
    %v1083 = vmul.f32 %v1082, 1.442695
    %v1084 = vpow.pop %v1083
    %v1085 = vadd.f32 %v1084, 1.0
    %v1086 = vrcp.pop %v1085
    %v1087 = vmul.f32 1.0, %v1086
    %v1088 = vxor.u32 %v1079, 2147483648
    %v1089 = vmul.f32 %v1088, 1.442695
    %v1090 = vpow.pop %v1089
    %v1091 = vadd.f32 %v1090, 1.0
    %v1092 = vrcp.pop %v1091
    %v1093 = vmul.f32 1.0, %v1092
    %v1094 = vtanh.pop %v1080
    %v1095 = vxor.u32 %v1081, 2147483648
    %v1096 = vmul.f32 %v1095, 1.442695
    %v1097 = vpow.pop %v1096
    %v1098 = vadd.f32 %v1097, 1.0
    %v1099 = vrcp.pop %v1098
    %v1100 = vmul.f32 1.0, %v1099
    %v1101 = vmul.f32 %v1093, %v896
    %v1102 = vmul.f32 %v1087, %v1094
    %v1103 = vadd.f32 %v1101, %v1102
    %v1104 = vtanh.pop %v1103
    %v1105 = vmul.f32 %v1100, %v1104
    %v1106 = vld [vmem:[%s0 + $0x4] sm:$0x1]
    %v1107 = vld [vmem:[%s0 + $0xc] sm:$0x1]
    %v1108 = vpack.c.bf16 %v1106, %v1106
    %v1109 = vpack.c.bf16 %v1107, %v1107
    %v1110 = vpack.c.bf16 %v1105, %v1105
    %1111 = vmatprep.subr.bf16.mxu0 %v226
    %1112 = vmatpush1.bf16.msra.mxu0 %v225
    %1113 = vmatprep.subr.bf16.mxu0 %v222
    %1114 = vmatpush1.bf16.msra.mxu0 %v221
    %1115 = vmatprep.subr.bf16.mxu0 %v218
    %1116 = vmatpush1.bf16.msra.mxu0 %v217
    %1117 = vmatprep.subr.bf16.mxu0 %v214
    %1118 = vmatpush1.bf16.msra.mxu0 %v213
    %1119 = vmatprep.subr.bf16.mxu0 %v210
    %1120 = vmatpush1.bf16.msra.mxu0 %v209
    %1121 = vmatprep.subr.bf16.mxu0 %v206
    %1122 = vmatpush1.bf16.msra.mxu0 %v205
    %1123 = vmatprep.subr.bf16.mxu0 %v202
    %1124 = vmatpush1.bf16.msra.mxu0 %v201
    %1125 = vmatprep.subr.bf16.mxu0 %v198
    %1126 = vmatpush1.bf16.msra.mxu0 %v197
    %1127 = vmatprep.subr.bf16.mxu0 0
    %1128 = vmatpush2.bf16.msra.mxu0 0
    %1129 = vmatprep.subr.bf16.mxu0 0
    %1130 = vmatpush2.bf16.msra.mxu0 0
    %1131 = vmatprep.subr.bf16.mxu0 0
    %1132 = vmatpush2.bf16.msra.mxu0 0
    %1133 = vmatprep.subr.bf16.mxu0 0
    %1134 = vmatpush2.bf16.msra.mxu0 0
    %1135 = vmatprep.subr.bf16.mxu0 0
    %1136 = vmatpush2.bf16.msra.mxu0 0
    %1137 = vmatprep.subr.bf16.mxu0 0
    %1138 = vmatpush2.bf16.msra.mxu0 0
    %1139 = vmatprep.subr.bf16.mxu0 0
    %1140 = vmatpush2.bf16.msra.mxu0 0
    %1141 = vmatprep.subr.bf16.mxu0 0
    %1142 = vmatpush2.bf16.msra.mxu0 0
    %1143 = vmatprep.mubr.bf16.mxu0 0
    %1144 = vmatmul.mubr.bf16.gmra.mxu0 %v1110
    %v1145 = vpop.f32.mrf.mxu0
    %v1146 = vadd.f32 0.0, %v1145
    %v1147 = vpop.f32.mrf.mxu0
    %v1148 = vadd.f32 0.0, %v1147
    %v1149 = vpop.f32.mrf.mxu0
    %v1150 = vpop.f32.mrf.mxu0
    %1151 = vdwg.mxu0
    %1152 = vmatprep.subr.bf16.mxu0 %v228
    %1153 = vmatpush1.bf16.msra.mxu0 %v227
    %1154 = vmatprep.subr.bf16.mxu0 %v224
    %1155 = vmatpush1.bf16.msra.mxu0 %v223
    %1156 = vmatprep.subr.bf16.mxu0 %v220
    %1157 = vmatpush1.bf16.msra.mxu0 %v219
    %1158 = vmatprep.subr.bf16.mxu0 %v216
    %1159 = vmatpush1.bf16.msra.mxu0 %v215
    %1160 = vmatprep.subr.bf16.mxu0 %v212
    %1161 = vmatpush1.bf16.msra.mxu0 %v211
    %1162 = vmatprep.subr.bf16.mxu0 %v208
    %1163 = vmatpush1.bf16.msra.mxu0 %v207
    %1164 = vmatprep.subr.bf16.mxu0 %v204
    %1165 = vmatpush1.bf16.msra.mxu0 %v203
    %1166 = vmatprep.subr.bf16.mxu0 %v200
    %1167 = vmatpush1.bf16.msra.mxu0 %v199
    %1168 = vmatprep.subr.bf16.mxu0 0
    %1169 = vmatpush2.bf16.msra.mxu0 0
    %1170 = vmatprep.subr.bf16.mxu0 0
    %1171 = vmatpush2.bf16.msra.mxu0 0
    %1172 = vmatprep.subr.bf16.mxu0 0
    %1173 = vmatpush2.bf16.msra.mxu0 0
    %1174 = vmatprep.subr.bf16.mxu0 0
    %1175 = vmatpush2.bf16.msra.mxu0 0
    %1176 = vmatprep.subr.bf16.mxu0 0
    %1177 = vmatpush2.bf16.msra.mxu0 0
    %1178 = vmatprep.subr.bf16.mxu0 0
    %1179 = vmatpush2.bf16.msra.mxu0 0
    %1180 = vmatprep.subr.bf16.mxu0 0
    %1181 = vmatpush2.bf16.msra.mxu0 0
    %1182 = vmatprep.subr.bf16.mxu0 0
    %1183 = vmatpush2.bf16.msra.mxu0 0
    %1184 = vmatprep.mubr.bf16.mxu0 0
    %1185 = vmatmul.mubr.bf16.gmra.mxu0 %v1110
    %v1186 = vpop.f32.mrf.mxu0
    %v1187 = vadd.f32 0.0, %v1186
    %v1188 = vpop.f32.mrf.mxu0
    %v1189 = vadd.f32 0.0, %v1188
    %v1190 = vpop.f32.mrf.mxu0
    %v1191 = vpop.f32.mrf.mxu0
    %1192 = vdwg.mxu0
    %v1195 = vunpack.c.l.b16 %v1108
    %v1196 = vunpack.c.l.b16 %v1109
    %v1197 = vrot.slane %v1196, 7
    %v1198 = vsel %vm348, %v1197, %v1195
    %v1199 = vpack.c.b16 %v1198, %v1198
    %v1201 = vsel %vm371, %v1199, 0
    %1203 = vmatprep.subr.bf16.mxu0 0
    %1204 = vmatpush1.bf16.msra.mxu0 0
    %1205 = vmatprep.subr.bf16.mxu0 0
    %1206 = vmatpush1.bf16.msra.mxu0 0
    %1207 = vmatprep.subr.bf16.mxu0 0
    %1208 = vmatpush1.bf16.msra.mxu0 0
    %1209 = vmatprep.subr.bf16.mxu0 0
    %1210 = vmatpush1.bf16.msra.mxu0 0
    %1211 = vmatprep.subr.bf16.mxu0 0
    %1212 = vmatpush1.bf16.msra.mxu0 0
    %1213 = vmatprep.subr.bf16.mxu0 0
    %1214 = vmatpush1.bf16.msra.mxu0 0
    %1215 = vmatprep.subr.bf16.mxu0 0
    %1216 = vmatpush1.bf16.msra.mxu0 0
    %1217 = vmatprep.subr.bf16.mxu0 %v364
    %1218 = vmatpush1.bf16.msra.mxu0 %v363
    %1219 = vmatprep.subr.bf16.mxu0 0
    %1220 = vmatpush2.bf16.msra.mxu0 0
    %1221 = vmatprep.subr.bf16.mxu0 0
    %1222 = vmatpush2.bf16.msra.mxu0 0
    %1223 = vmatprep.subr.bf16.mxu0 0
    %1224 = vmatpush2.bf16.msra.mxu0 0
    %1225 = vmatprep.subr.bf16.mxu0 0
    %1226 = vmatpush2.bf16.msra.mxu0 0
    %1227 = vmatprep.subr.bf16.mxu0 0
    %1228 = vmatpush2.bf16.msra.mxu0 0
    %1229 = vmatprep.subr.bf16.mxu0 0
    %1230 = vmatpush2.bf16.msra.mxu0 0
    %1231 = vmatprep.subr.bf16.mxu0 0
    %1232 = vmatpush2.bf16.msra.mxu0 0
    %1233 = vmatprep.subr.bf16.mxu0 0
    %1234 = vmatpush2.bf16.msra.mxu0 0
    %1235 = vmatprep.mubr.bf16.mxu0 0
    %1236 = vmatmul.mubr.bf16.gmra.mxu0 %v1201
    %v1237 = vpop.f32.mrf.mxu0
    %v1238 = vadd.f32 %v1146, %v1237
    %v1239 = vpop.f32.mrf.mxu0
    %v1240 = vadd.f32 %v1148, %v1239
    %v1241 = vpop.f32.mrf.mxu0
    %v1242 = vpop.f32.mrf.mxu0
    %1243 = vdwg.mxu0
    %1244 = vmatprep.subr.bf16.mxu0 0
    %1245 = vmatpush1.bf16.msra.mxu0 0
    %1246 = vmatprep.subr.bf16.mxu0 0
    %1247 = vmatpush1.bf16.msra.mxu0 0
    %1248 = vmatprep.subr.bf16.mxu0 0
    %1249 = vmatpush1.bf16.msra.mxu0 0
    %1250 = vmatprep.subr.bf16.mxu0 0
    %1251 = vmatpush1.bf16.msra.mxu0 0
    %1252 = vmatprep.subr.bf16.mxu0 0
    %1253 = vmatpush1.bf16.msra.mxu0 0
    %1254 = vmatprep.subr.bf16.mxu0 0
    %1255 = vmatpush1.bf16.msra.mxu0 0
    %1256 = vmatprep.subr.bf16.mxu0 0
    %1257 = vmatpush1.bf16.msra.mxu0 0
    %1258 = vmatprep.subr.bf16.mxu0 %v366
    %1259 = vmatpush1.bf16.msra.mxu0 %v365
    %1260 = vmatprep.subr.bf16.mxu0 0
    %1261 = vmatpush2.bf16.msra.mxu0 0
    %1262 = vmatprep.subr.bf16.mxu0 0
    %1263 = vmatpush2.bf16.msra.mxu0 0
    %1264 = vmatprep.subr.bf16.mxu0 0
    %1265 = vmatpush2.bf16.msra.mxu0 0
    %1266 = vmatprep.subr.bf16.mxu0 0
    %1267 = vmatpush2.bf16.msra.mxu0 0
    %1268 = vmatprep.subr.bf16.mxu0 0
    %1269 = vmatpush2.bf16.msra.mxu0 0
    %1270 = vmatprep.subr.bf16.mxu0 0
    %1271 = vmatpush2.bf16.msra.mxu0 0
    %1272 = vmatprep.subr.bf16.mxu0 0
    %1273 = vmatpush2.bf16.msra.mxu0 0
    %1274 = vmatprep.subr.bf16.mxu0 0
    %1275 = vmatpush2.bf16.msra.mxu0 0
    %1276 = vmatprep.mubr.bf16.mxu0 0
    %1277 = vmatmul.mubr.bf16.gmra.mxu0 %v1201
    %v1278 = vpop.f32.mrf.mxu0
    %v1279 = vadd.f32 %v1187, %v1278
    %v1280 = vpop.f32.mrf.mxu0
    %v1281 = vadd.f32 %v1189, %v1280
    %v1282 = vpop.f32.mrf.mxu0
    %v1283 = vpop.f32.mrf.mxu0
    %1284 = vdwg.mxu0
    %v1285 = vadd.f32 %v1238, %v48
    %v1286 = vadd.f32 %v1240, %v52
    %v1287 = vadd.f32 %v1279, %v56
    %v1288 = vadd.f32 %v1281, %v60
    %v1289 = vxor.u32 %v1285, 2147483648
    %v1290 = vmul.f32 %v1289, 1.442695
    %v1291 = vpow.pop %v1290
    %v1292 = vadd.f32 %v1291, 1.0
    %v1293 = vrcp.pop %v1292
    %v1294 = vmul.f32 1.0, %v1293
    %v1295 = vxor.u32 %v1286, 2147483648
    %v1296 = vmul.f32 %v1295, 1.442695
    %v1297 = vpow.pop %v1296
    %v1298 = vadd.f32 %v1297, 1.0
    %v1299 = vrcp.pop %v1298
    %v1300 = vmul.f32 1.0, %v1299
    %v1301 = vtanh.pop %v1287
    %v1302 = vxor.u32 %v1288, 2147483648
    %v1303 = vmul.f32 %v1302, 1.442695
    %v1304 = vpow.pop %v1303
    %v1305 = vadd.f32 %v1304, 1.0
    %v1306 = vrcp.pop %v1305
    %v1307 = vmul.f32 1.0, %v1306
    %v1308 = vmul.f32 %v1300, %v1103
    %v1309 = vmul.f32 %v1294, %v1301
    %v1310 = vadd.f32 %v1308, %v1309
    %v1311 = vtanh.pop %v1310
    %v1312 = vmul.f32 %v1307, %v1311
    %v1313 = vld [vmem:[%s0 + $0x5] sm:$0x1]
    %v1314 = vld [vmem:[%s0 + $0xd] sm:$0x1]
    %v1315 = vpack.c.bf16 %v1313, %v1313
    %v1316 = vpack.c.bf16 %v1314, %v1314
    %v1317 = vpack.c.bf16 %v1312, %v1312
    %1318 = vmatprep.subr.bf16.mxu0 %v226
    %1319 = vmatpush1.bf16.msra.mxu0 %v225
    %1320 = vmatprep.subr.bf16.mxu0 %v222
    %1321 = vmatpush1.bf16.msra.mxu0 %v221
    %1322 = vmatprep.subr.bf16.mxu0 %v218
    %1323 = vmatpush1.bf16.msra.mxu0 %v217
    %1324 = vmatprep.subr.bf16.mxu0 %v214
    %1325 = vmatpush1.bf16.msra.mxu0 %v213
    %1326 = vmatprep.subr.bf16.mxu0 %v210
    %1327 = vmatpush1.bf16.msra.mxu0 %v209
    %1328 = vmatprep.subr.bf16.mxu0 %v206
    %1329 = vmatpush1.bf16.msra.mxu0 %v205
    %1330 = vmatprep.subr.bf16.mxu0 %v202
    %1331 = vmatpush1.bf16.msra.mxu0 %v201
    %1332 = vmatprep.subr.bf16.mxu0 %v198
    %1333 = vmatpush1.bf16.msra.mxu0 %v197
    %1334 = vmatprep.subr.bf16.mxu0 0
    %1335 = vmatpush2.bf16.msra.mxu0 0
    %1336 = vmatprep.subr.bf16.mxu0 0
    %1337 = vmatpush2.bf16.msra.mxu0 0
    %1338 = vmatprep.subr.bf16.mxu0 0
    %1339 = vmatpush2.bf16.msra.mxu0 0
    %1340 = vmatprep.subr.bf16.mxu0 0
    %1341 = vmatpush2.bf16.msra.mxu0 0
    %1342 = vmatprep.subr.bf16.mxu0 0
    %1343 = vmatpush2.bf16.msra.mxu0 0
    %1344 = vmatprep.subr.bf16.mxu0 0
    %1345 = vmatpush2.bf16.msra.mxu0 0
    %1346 = vmatprep.subr.bf16.mxu0 0
    %1347 = vmatpush2.bf16.msra.mxu0 0
    %1348 = vmatprep.subr.bf16.mxu0 0
    %1349 = vmatpush2.bf16.msra.mxu0 0
    %1350 = vmatprep.mubr.bf16.mxu0 0
    %1351 = vmatmul.mubr.bf16.gmra.mxu0 %v1317
    %v1352 = vpop.f32.mrf.mxu0
    %v1353 = vadd.f32 0.0, %v1352
    %v1354 = vpop.f32.mrf.mxu0
    %v1355 = vadd.f32 0.0, %v1354
    %v1356 = vpop.f32.mrf.mxu0
    %v1357 = vpop.f32.mrf.mxu0
    %1358 = vdwg.mxu0
    %1359 = vmatprep.subr.bf16.mxu0 %v228
    %1360 = vmatpush1.bf16.msra.mxu0 %v227
    %1361 = vmatprep.subr.bf16.mxu0 %v224
    %1362 = vmatpush1.bf16.msra.mxu0 %v223
    %1363 = vmatprep.subr.bf16.mxu0 %v220
    %1364 = vmatpush1.bf16.msra.mxu0 %v219
    %1365 = vmatprep.subr.bf16.mxu0 %v216
    %1366 = vmatpush1.bf16.msra.mxu0 %v215
    %1367 = vmatprep.subr.bf16.mxu0 %v212
    %1368 = vmatpush1.bf16.msra.mxu0 %v211
    %1369 = vmatprep.subr.bf16.mxu0 %v208
    %1370 = vmatpush1.bf16.msra.mxu0 %v207
    %1371 = vmatprep.subr.bf16.mxu0 %v204
    %1372 = vmatpush1.bf16.msra.mxu0 %v203
    %1373 = vmatprep.subr.bf16.mxu0 %v200
    %1374 = vmatpush1.bf16.msra.mxu0 %v199
    %1375 = vmatprep.subr.bf16.mxu0 0
    %1376 = vmatpush2.bf16.msra.mxu0 0
    %1377 = vmatprep.subr.bf16.mxu0 0
    %1378 = vmatpush2.bf16.msra.mxu0 0
    %1379 = vmatprep.subr.bf16.mxu0 0
    %1380 = vmatpush2.bf16.msra.mxu0 0
    %1381 = vmatprep.subr.bf16.mxu0 0
    %1382 = vmatpush2.bf16.msra.mxu0 0
    %1383 = vmatprep.subr.bf16.mxu0 0
    %1384 = vmatpush2.bf16.msra.mxu0 0
    %1385 = vmatprep.subr.bf16.mxu0 0
    %1386 = vmatpush2.bf16.msra.mxu0 0
    %1387 = vmatprep.subr.bf16.mxu0 0
    %1388 = vmatpush2.bf16.msra.mxu0 0
    %1389 = vmatprep.subr.bf16.mxu0 0
    %1390 = vmatpush2.bf16.msra.mxu0 0
    %1391 = vmatprep.mubr.bf16.mxu0 0
    %1392 = vmatmul.mubr.bf16.gmra.mxu0 %v1317
    %v1393 = vpop.f32.mrf.mxu0
    %v1394 = vadd.f32 0.0, %v1393
    %v1395 = vpop.f32.mrf.mxu0
    %v1396 = vadd.f32 0.0, %v1395
    %v1397 = vpop.f32.mrf.mxu0
    %v1398 = vpop.f32.mrf.mxu0
    %1399 = vdwg.mxu0
    %v1402 = vunpack.c.l.b16 %v1315
    %v1403 = vunpack.c.l.b16 %v1316
    %v1404 = vrot.slane %v1403, 7
    %v1405 = vsel %vm348, %v1404, %v1402
    %v1406 = vpack.c.b16 %v1405, %v1405
    %v1408 = vsel %vm371, %v1406, 0
    %1410 = vmatprep.subr.bf16.mxu0 0
    %1411 = vmatpush1.bf16.msra.mxu0 0
    %1412 = vmatprep.subr.bf16.mxu0 0
    %1413 = vmatpush1.bf16.msra.mxu0 0
    %1414 = vmatprep.subr.bf16.mxu0 0
    %1415 = vmatpush1.bf16.msra.mxu0 0
    %1416 = vmatprep.subr.bf16.mxu0 0
    %1417 = vmatpush1.bf16.msra.mxu0 0
    %1418 = vmatprep.subr.bf16.mxu0 0
    %1419 = vmatpush1.bf16.msra.mxu0 0
    %1420 = vmatprep.subr.bf16.mxu0 0
    %1421 = vmatpush1.bf16.msra.mxu0 0
    %1422 = vmatprep.subr.bf16.mxu0 0
    %1423 = vmatpush1.bf16.msra.mxu0 0
    %1424 = vmatprep.subr.bf16.mxu0 %v364
    %1425 = vmatpush1.bf16.msra.mxu0 %v363
    %1426 = vmatprep.subr.bf16.mxu0 0
    %1427 = vmatpush2.bf16.msra.mxu0 0
    %1428 = vmatprep.subr.bf16.mxu0 0
    %1429 = vmatpush2.bf16.msra.mxu0 0
    %1430 = vmatprep.subr.bf16.mxu0 0
    %1431 = vmatpush2.bf16.msra.mxu0 0
    %1432 = vmatprep.subr.bf16.mxu0 0
    %1433 = vmatpush2.bf16.msra.mxu0 0
    %1434 = vmatprep.subr.bf16.mxu0 0
    %1435 = vmatpush2.bf16.msra.mxu0 0
    %1436 = vmatprep.subr.bf16.mxu0 0
    %1437 = vmatpush2.bf16.msra.mxu0 0
    %1438 = vmatprep.subr.bf16.mxu0 0
    %1439 = vmatpush2.bf16.msra.mxu0 0
    %1440 = vmatprep.subr.bf16.mxu0 0
    %1441 = vmatpush2.bf16.msra.mxu0 0
    %1442 = vmatprep.mubr.bf16.mxu0 0
    %1443 = vmatmul.mubr.bf16.gmra.mxu0 %v1408
    %v1444 = vpop.f32.mrf.mxu0
    %v1445 = vadd.f32 %v1353, %v1444
    %v1446 = vpop.f32.mrf.mxu0
    %v1447 = vadd.f32 %v1355, %v1446
    %v1448 = vpop.f32.mrf.mxu0
    %v1449 = vpop.f32.mrf.mxu0
    %1450 = vdwg.mxu0
    %1451 = vmatprep.subr.bf16.mxu0 0
    %1452 = vmatpush1.bf16.msra.mxu0 0
    %1453 = vmatprep.subr.bf16.mxu0 0
    %1454 = vmatpush1.bf16.msra.mxu0 0
    %1455 = vmatprep.subr.bf16.mxu0 0
    %1456 = vmatpush1.bf16.msra.mxu0 0
    %1457 = vmatprep.subr.bf16.mxu0 0
    %1458 = vmatpush1.bf16.msra.mxu0 0
    %1459 = vmatprep.subr.bf16.mxu0 0
    %1460 = vmatpush1.bf16.msra.mxu0 0
    %1461 = vmatprep.subr.bf16.mxu0 0
    %1462 = vmatpush1.bf16.msra.mxu0 0
    %1463 = vmatprep.subr.bf16.mxu0 0
    %1464 = vmatpush1.bf16.msra.mxu0 0
    %1465 = vmatprep.subr.bf16.mxu0 %v366
    %1466 = vmatpush1.bf16.msra.mxu0 %v365
    %1467 = vmatprep.subr.bf16.mxu0 0
    %1468 = vmatpush2.bf16.msra.mxu0 0
    %1469 = vmatprep.subr.bf16.mxu0 0
    %1470 = vmatpush2.bf16.msra.mxu0 0
    %1471 = vmatprep.subr.bf16.mxu0 0
    %1472 = vmatpush2.bf16.msra.mxu0 0
    %1473 = vmatprep.subr.bf16.mxu0 0
    %1474 = vmatpush2.bf16.msra.mxu0 0
    %1475 = vmatprep.subr.bf16.mxu0 0
    %1476 = vmatpush2.bf16.msra.mxu0 0
    %1477 = vmatprep.subr.bf16.mxu0 0
    %1478 = vmatpush2.bf16.msra.mxu0 0
    %1479 = vmatprep.subr.bf16.mxu0 0
    %1480 = vmatpush2.bf16.msra.mxu0 0
    %1481 = vmatprep.subr.bf16.mxu0 0
    %1482 = vmatpush2.bf16.msra.mxu0 0
    %1483 = vmatprep.mubr.bf16.mxu0 0
    %1484 = vmatmul.mubr.bf16.gmra.mxu0 %v1408
    %v1485 = vpop.f32.mrf.mxu0
    %v1486 = vadd.f32 %v1394, %v1485
    %v1487 = vpop.f32.mrf.mxu0
    %v1488 = vadd.f32 %v1396, %v1487
    %v1489 = vpop.f32.mrf.mxu0
    %v1490 = vpop.f32.mrf.mxu0
    %1491 = vdwg.mxu0
    %v1492 = vadd.f32 %v1445, %v48
    %v1493 = vadd.f32 %v1447, %v52
    %v1494 = vadd.f32 %v1486, %v56
    %v1495 = vadd.f32 %v1488, %v60
    %v1496 = vxor.u32 %v1492, 2147483648
    %v1497 = vmul.f32 %v1496, 1.442695
    %v1498 = vpow.pop %v1497
    %v1499 = vadd.f32 %v1498, 1.0
    %v1500 = vrcp.pop %v1499
    %v1501 = vmul.f32 1.0, %v1500
    %v1502 = vxor.u32 %v1493, 2147483648
    %v1503 = vmul.f32 %v1502, 1.442695
    %v1504 = vpow.pop %v1503
    %v1505 = vadd.f32 %v1504, 1.0
    %v1506 = vrcp.pop %v1505
    %v1507 = vmul.f32 1.0, %v1506
    %v1508 = vtanh.pop %v1494
    %v1509 = vxor.u32 %v1495, 2147483648
    %v1510 = vmul.f32 %v1509, 1.442695
    %v1511 = vpow.pop %v1510
    %v1512 = vadd.f32 %v1511, 1.0
    %v1513 = vrcp.pop %v1512
    %v1514 = vmul.f32 1.0, %v1513
    %v1515 = vmul.f32 %v1507, %v1310
    %v1516 = vmul.f32 %v1501, %v1508
    %v1517 = vadd.f32 %v1515, %v1516
    %v1518 = vtanh.pop %v1517
    %v1519 = vmul.f32 %v1514, %v1518
    %v1520 = vld [vmem:[%s0 + $0x6] sm:$0x1]
    %v1521 = vld [vmem:[%s0 + $0xe] sm:$0x1]
    %v1522 = vpack.c.bf16 %v1520, %v1520
    %v1523 = vpack.c.bf16 %v1521, %v1521
    %v1524 = vpack.c.bf16 %v1519, %v1519
    %1525 = vmatprep.subr.bf16.mxu0 %v226
    %1526 = vmatpush1.bf16.msra.mxu0 %v225
    %1527 = vmatprep.subr.bf16.mxu0 %v222
    %1528 = vmatpush1.bf16.msra.mxu0 %v221
    %1529 = vmatprep.subr.bf16.mxu0 %v218
    %1530 = vmatpush1.bf16.msra.mxu0 %v217
    %1531 = vmatprep.subr.bf16.mxu0 %v214
    %1532 = vmatpush1.bf16.msra.mxu0 %v213
    %1533 = vmatprep.subr.bf16.mxu0 %v210
    %1534 = vmatpush1.bf16.msra.mxu0 %v209
    %1535 = vmatprep.subr.bf16.mxu0 %v206
    %1536 = vmatpush1.bf16.msra.mxu0 %v205
    %1537 = vmatprep.subr.bf16.mxu0 %v202
    %1538 = vmatpush1.bf16.msra.mxu0 %v201
    %1539 = vmatprep.subr.bf16.mxu0 %v198
    %1540 = vmatpush1.bf16.msra.mxu0 %v197
    %1541 = vmatprep.subr.bf16.mxu0 0
    %1542 = vmatpush2.bf16.msra.mxu0 0
    %1543 = vmatprep.subr.bf16.mxu0 0
    %1544 = vmatpush2.bf16.msra.mxu0 0
    %1545 = vmatprep.subr.bf16.mxu0 0
    %1546 = vmatpush2.bf16.msra.mxu0 0
    %1547 = vmatprep.subr.bf16.mxu0 0
    %1548 = vmatpush2.bf16.msra.mxu0 0
    %1549 = vmatprep.subr.bf16.mxu0 0
    %1550 = vmatpush2.bf16.msra.mxu0 0
    %1551 = vmatprep.subr.bf16.mxu0 0
    %1552 = vmatpush2.bf16.msra.mxu0 0
    %1553 = vmatprep.subr.bf16.mxu0 0
    %1554 = vmatpush2.bf16.msra.mxu0 0
    %1555 = vmatprep.subr.bf16.mxu0 0
    %1556 = vmatpush2.bf16.msra.mxu0 0
    %1557 = vmatprep.mubr.bf16.mxu0 0
    %1558 = vmatmul.mubr.bf16.gmra.mxu0 %v1524
    %v1559 = vpop.f32.mrf.mxu0
    %v1560 = vadd.f32 0.0, %v1559
    %v1561 = vpop.f32.mrf.mxu0
    %v1562 = vadd.f32 0.0, %v1561
    %v1563 = vpop.f32.mrf.mxu0
    %v1564 = vpop.f32.mrf.mxu0
    %1565 = vdwg.mxu0
    %1566 = vmatprep.subr.bf16.mxu0 %v228
    %1567 = vmatpush1.bf16.msra.mxu0 %v227
    %1568 = vmatprep.subr.bf16.mxu0 %v224
    %1569 = vmatpush1.bf16.msra.mxu0 %v223
    %1570 = vmatprep.subr.bf16.mxu0 %v220
    %1571 = vmatpush1.bf16.msra.mxu0 %v219
    %1572 = vmatprep.subr.bf16.mxu0 %v216
    %1573 = vmatpush1.bf16.msra.mxu0 %v215
    %1574 = vmatprep.subr.bf16.mxu0 %v212
    %1575 = vmatpush1.bf16.msra.mxu0 %v211
    %1576 = vmatprep.subr.bf16.mxu0 %v208
    %1577 = vmatpush1.bf16.msra.mxu0 %v207
    %1578 = vmatprep.subr.bf16.mxu0 %v204
    %1579 = vmatpush1.bf16.msra.mxu0 %v203
    %1580 = vmatprep.subr.bf16.mxu0 %v200
    %1581 = vmatpush1.bf16.msra.mxu0 %v199
    %1582 = vmatprep.subr.bf16.mxu0 0
    %1583 = vmatpush2.bf16.msra.mxu0 0
    %1584 = vmatprep.subr.bf16.mxu0 0
    %1585 = vmatpush2.bf16.msra.mxu0 0
    %1586 = vmatprep.subr.bf16.mxu0 0
    %1587 = vmatpush2.bf16.msra.mxu0 0
    %1588 = vmatprep.subr.bf16.mxu0 0
    %1589 = vmatpush2.bf16.msra.mxu0 0
    %1590 = vmatprep.subr.bf16.mxu0 0
    %1591 = vmatpush2.bf16.msra.mxu0 0
    %1592 = vmatprep.subr.bf16.mxu0 0
    %1593 = vmatpush2.bf16.msra.mxu0 0
    %1594 = vmatprep.subr.bf16.mxu0 0
    %1595 = vmatpush2.bf16.msra.mxu0 0
    %1596 = vmatprep.subr.bf16.mxu0 0
    %1597 = vmatpush2.bf16.msra.mxu0 0
    %1598 = vmatprep.mubr.bf16.mxu0 0
    %1599 = vmatmul.mubr.bf16.gmra.mxu0 %v1524
    %v1600 = vpop.f32.mrf.mxu0
    %v1601 = vadd.f32 0.0, %v1600
    %v1602 = vpop.f32.mrf.mxu0
    %v1603 = vadd.f32 0.0, %v1602
    %v1604 = vpop.f32.mrf.mxu0
    %v1605 = vpop.f32.mrf.mxu0
    %1606 = vdwg.mxu0
    %v1609 = vunpack.c.l.b16 %v1522
    %v1610 = vunpack.c.l.b16 %v1523
    %v1611 = vrot.slane %v1610, 7
    %v1612 = vsel %vm348, %v1611, %v1609
    %v1613 = vpack.c.b16 %v1612, %v1612
    %v1615 = vsel %vm371, %v1613, 0
    %1617 = vmatprep.subr.bf16.mxu0 0
    %1618 = vmatpush1.bf16.msra.mxu0 0
    %1619 = vmatprep.subr.bf16.mxu0 0
    %1620 = vmatpush1.bf16.msra.mxu0 0
    %1621 = vmatprep.subr.bf16.mxu0 0
    %1622 = vmatpush1.bf16.msra.mxu0 0
    %1623 = vmatprep.subr.bf16.mxu0 0
    %1624 = vmatpush1.bf16.msra.mxu0 0
    %1625 = vmatprep.subr.bf16.mxu0 0
    %1626 = vmatpush1.bf16.msra.mxu0 0
    %1627 = vmatprep.subr.bf16.mxu0 0
    %1628 = vmatpush1.bf16.msra.mxu0 0
    %1629 = vmatprep.subr.bf16.mxu0 0
    %1630 = vmatpush1.bf16.msra.mxu0 0
    %1631 = vmatprep.subr.bf16.mxu0 %v364
    %1632 = vmatpush1.bf16.msra.mxu0 %v363
    %1633 = vmatprep.subr.bf16.mxu0 0
    %1634 = vmatpush2.bf16.msra.mxu0 0
    %1635 = vmatprep.subr.bf16.mxu0 0
    %1636 = vmatpush2.bf16.msra.mxu0 0
    %1637 = vmatprep.subr.bf16.mxu0 0
    %1638 = vmatpush2.bf16.msra.mxu0 0
    %1639 = vmatprep.subr.bf16.mxu0 0
    %1640 = vmatpush2.bf16.msra.mxu0 0
    %1641 = vmatprep.subr.bf16.mxu0 0
    %1642 = vmatpush2.bf16.msra.mxu0 0
    %1643 = vmatprep.subr.bf16.mxu0 0
    %1644 = vmatpush2.bf16.msra.mxu0 0
    %1645 = vmatprep.subr.bf16.mxu0 0
    %1646 = vmatpush2.bf16.msra.mxu0 0
    %1647 = vmatprep.subr.bf16.mxu0 0
    %1648 = vmatpush2.bf16.msra.mxu0 0
    %1649 = vmatprep.mubr.bf16.mxu0 0
    %1650 = vmatmul.mubr.bf16.gmra.mxu0 %v1615
    %v1651 = vpop.f32.mrf.mxu0
    %v1652 = vadd.f32 %v1560, %v1651
    %v1653 = vpop.f32.mrf.mxu0
    %v1654 = vadd.f32 %v1562, %v1653
    %v1655 = vpop.f32.mrf.mxu0
    %v1656 = vpop.f32.mrf.mxu0
    %1657 = vdwg.mxu0
    %1658 = vmatprep.subr.bf16.mxu0 0
    %1659 = vmatpush1.bf16.msra.mxu0 0
    %1660 = vmatprep.subr.bf16.mxu0 0
    %1661 = vmatpush1.bf16.msra.mxu0 0
    %1662 = vmatprep.subr.bf16.mxu0 0
    %1663 = vmatpush1.bf16.msra.mxu0 0
    %1664 = vmatprep.subr.bf16.mxu0 0
    %1665 = vmatpush1.bf16.msra.mxu0 0
    %1666 = vmatprep.subr.bf16.mxu0 0
    %1667 = vmatpush1.bf16.msra.mxu0 0
    %1668 = vmatprep.subr.bf16.mxu0 0
    %1669 = vmatpush1.bf16.msra.mxu0 0
    %1670 = vmatprep.subr.bf16.mxu0 0
    %1671 = vmatpush1.bf16.msra.mxu0 0
    %1672 = vmatprep.subr.bf16.mxu0 %v366
    %1673 = vmatpush1.bf16.msra.mxu0 %v365
    %1674 = vmatprep.subr.bf16.mxu0 0
    %1675 = vmatpush2.bf16.msra.mxu0 0
    %1676 = vmatprep.subr.bf16.mxu0 0
    %1677 = vmatpush2.bf16.msra.mxu0 0
    %1678 = vmatprep.subr.bf16.mxu0 0
    %1679 = vmatpush2.bf16.msra.mxu0 0
    %1680 = vmatprep.subr.bf16.mxu0 0
    %1681 = vmatpush2.bf16.msra.mxu0 0
    %1682 = vmatprep.subr.bf16.mxu0 0
    %1683 = vmatpush2.bf16.msra.mxu0 0
    %1684 = vmatprep.subr.bf16.mxu0 0
    %1685 = vmatpush2.bf16.msra.mxu0 0
    %1686 = vmatprep.subr.bf16.mxu0 0
    %1687 = vmatpush2.bf16.msra.mxu0 0
    %1688 = vmatprep.subr.bf16.mxu0 0
    %1689 = vmatpush2.bf16.msra.mxu0 0
    %1690 = vmatprep.mubr.bf16.mxu0 0
    %1691 = vmatmul.mubr.bf16.gmra.mxu0 %v1615
    %v1692 = vpop.f32.mrf.mxu0
    %v1693 = vadd.f32 %v1601, %v1692
    %v1694 = vpop.f32.mrf.mxu0
    %v1695 = vadd.f32 %v1603, %v1694
    %v1696 = vpop.f32.mrf.mxu0
    %v1697 = vpop.f32.mrf.mxu0
    %1698 = vdwg.mxu0
    %v1699 = vadd.f32 %v1652, %v48
    %v1700 = vadd.f32 %v1654, %v52
    %v1701 = vadd.f32 %v1693, %v56
    %v1702 = vadd.f32 %v1695, %v60
    %v1703 = vxor.u32 %v1699, 2147483648
    %v1704 = vmul.f32 %v1703, 1.442695
    %v1705 = vpow.pop %v1704
    %v1706 = vadd.f32 %v1705, 1.0
    %v1707 = vrcp.pop %v1706
    %v1708 = vmul.f32 1.0, %v1707
    %v1709 = vxor.u32 %v1700, 2147483648
    %v1710 = vmul.f32 %v1709, 1.442695
    %v1711 = vpow.pop %v1710
    %v1712 = vadd.f32 %v1711, 1.0
    %v1713 = vrcp.pop %v1712
    %v1714 = vmul.f32 1.0, %v1713
    %v1715 = vtanh.pop %v1701
    %v1716 = vxor.u32 %v1702, 2147483648
    %v1717 = vmul.f32 %v1716, 1.442695
    %v1718 = vpow.pop %v1717
    %v1719 = vadd.f32 %v1718, 1.0
    %v1720 = vrcp.pop %v1719
    %v1721 = vmul.f32 1.0, %v1720
    %v1722 = vmul.f32 %v1714, %v1517
    %v1723 = vmul.f32 %v1708, %v1715
    %v1724 = vadd.f32 %v1722, %v1723
    %v1725 = vtanh.pop %v1724
    %v1726 = vmul.f32 %v1721, %v1725
    %v1727 = vld [vmem:[%s0 + $0x7] sm:$0x1]
    %v1728 = vld [vmem:[%s0 + $0xf] sm:$0x1]
    %v1729 = vpack.c.bf16 %v1727, %v1727
    %v1730 = vpack.c.bf16 %v1728, %v1728
    %v1731 = vpack.c.bf16 %v1726, %v1726
    %1732 = vmatprep.subr.bf16.mxu0 %v226
    %1733 = vmatpush1.bf16.msra.mxu0 %v225
    %1734 = vmatprep.subr.bf16.mxu0 %v222
    %1735 = vmatpush1.bf16.msra.mxu0 %v221
    %1736 = vmatprep.subr.bf16.mxu0 %v218
    %1737 = vmatpush1.bf16.msra.mxu0 %v217
    %1738 = vmatprep.subr.bf16.mxu0 %v214
    %1739 = vmatpush1.bf16.msra.mxu0 %v213
    %1740 = vmatprep.subr.bf16.mxu0 %v210
    %1741 = vmatpush1.bf16.msra.mxu0 %v209
    %1742 = vmatprep.subr.bf16.mxu0 %v206
    %1743 = vmatpush1.bf16.msra.mxu0 %v205
    %1744 = vmatprep.subr.bf16.mxu0 %v202
    %1745 = vmatpush1.bf16.msra.mxu0 %v201
    %1746 = vmatprep.subr.bf16.mxu0 %v198
    %1747 = vmatpush1.bf16.msra.mxu0 %v197
    %1748 = vmatprep.subr.bf16.mxu0 0
    %1749 = vmatpush2.bf16.msra.mxu0 0
    %1750 = vmatprep.subr.bf16.mxu0 0
    %1751 = vmatpush2.bf16.msra.mxu0 0
    %1752 = vmatprep.subr.bf16.mxu0 0
    %1753 = vmatpush2.bf16.msra.mxu0 0
    %1754 = vmatprep.subr.bf16.mxu0 0
    %1755 = vmatpush2.bf16.msra.mxu0 0
    %1756 = vmatprep.subr.bf16.mxu0 0
    %1757 = vmatpush2.bf16.msra.mxu0 0
    %1758 = vmatprep.subr.bf16.mxu0 0
    %1759 = vmatpush2.bf16.msra.mxu0 0
    %1760 = vmatprep.subr.bf16.mxu0 0
    %1761 = vmatpush2.bf16.msra.mxu0 0
    %1762 = vmatprep.subr.bf16.mxu0 0
    %1763 = vmatpush2.bf16.msra.mxu0 0
    %1764 = vmatprep.mubr.bf16.mxu0 0
    %1765 = vmatmul.mubr.bf16.gmra.mxu0 %v1731
    %v1766 = vpop.f32.mrf.mxu0
    %v1767 = vadd.f32 0.0, %v1766
    %v1768 = vpop.f32.mrf.mxu0
    %v1769 = vadd.f32 0.0, %v1768
    %v1770 = vpop.f32.mrf.mxu0
    %v1771 = vpop.f32.mrf.mxu0
    %1772 = vdwg.mxu0
    %1773 = vmatprep.subr.bf16.mxu0 %v228
    %1774 = vmatpush1.bf16.msra.mxu0 %v227
    %1775 = vmatprep.subr.bf16.mxu0 %v224
    %1776 = vmatpush1.bf16.msra.mxu0 %v223
    %1777 = vmatprep.subr.bf16.mxu0 %v220
    %1778 = vmatpush1.bf16.msra.mxu0 %v219
    %1779 = vmatprep.subr.bf16.mxu0 %v216
    %1780 = vmatpush1.bf16.msra.mxu0 %v215
    %1781 = vmatprep.subr.bf16.mxu0 %v212
    %1782 = vmatpush1.bf16.msra.mxu0 %v211
    %1783 = vmatprep.subr.bf16.mxu0 %v208
    %1784 = vmatpush1.bf16.msra.mxu0 %v207
    %1785 = vmatprep.subr.bf16.mxu0 %v204
    %1786 = vmatpush1.bf16.msra.mxu0 %v203
    %1787 = vmatprep.subr.bf16.mxu0 %v200
    %1788 = vmatpush1.bf16.msra.mxu0 %v199
    %1789 = vmatprep.subr.bf16.mxu0 0
    %1790 = vmatpush2.bf16.msra.mxu0 0
    %1791 = vmatprep.subr.bf16.mxu0 0
    %1792 = vmatpush2.bf16.msra.mxu0 0
    %1793 = vmatprep.subr.bf16.mxu0 0
    %1794 = vmatpush2.bf16.msra.mxu0 0
    %1795 = vmatprep.subr.bf16.mxu0 0
    %1796 = vmatpush2.bf16.msra.mxu0 0
    %1797 = vmatprep.subr.bf16.mxu0 0
    %1798 = vmatpush2.bf16.msra.mxu0 0
    %1799 = vmatprep.subr.bf16.mxu0 0
    %1800 = vmatpush2.bf16.msra.mxu0 0
    %1801 = vmatprep.subr.bf16.mxu0 0
    %1802 = vmatpush2.bf16.msra.mxu0 0
    %1803 = vmatprep.subr.bf16.mxu0 0
    %1804 = vmatpush2.bf16.msra.mxu0 0
    %1805 = vmatprep.mubr.bf16.mxu0 0
    %1806 = vmatmul.mubr.bf16.gmra.mxu0 %v1731
    %v1807 = vpop.f32.mrf.mxu0
    %v1808 = vadd.f32 0.0, %v1807
    %v1809 = vpop.f32.mrf.mxu0
    %v1810 = vadd.f32 0.0, %v1809
    %v1811 = vpop.f32.mrf.mxu0
    %v1812 = vpop.f32.mrf.mxu0
    %1813 = vdwg.mxu0
    %v1816 = vunpack.c.l.b16 %v1729
    %v1817 = vunpack.c.l.b16 %v1730
    %v1818 = vrot.slane %v1817, 7
    %v1819 = vsel %vm348, %v1818, %v1816
    %v1820 = vpack.c.b16 %v1819, %v1819
    %v1822 = vsel %vm371, %v1820, 0
    %1824 = vmatprep.subr.bf16.mxu0 0
    %1825 = vmatpush1.bf16.msra.mxu0 0
    %1826 = vmatprep.subr.bf16.mxu0 0
    %1827 = vmatpush1.bf16.msra.mxu0 0
    %1828 = vmatprep.subr.bf16.mxu0 0
    %1829 = vmatpush1.bf16.msra.mxu0 0
    %1830 = vmatprep.subr.bf16.mxu0 0
    %1831 = vmatpush1.bf16.msra.mxu0 0
    %1832 = vmatprep.subr.bf16.mxu0 0
    %1833 = vmatpush1.bf16.msra.mxu0 0
    %1834 = vmatprep.subr.bf16.mxu0 0
    %1835 = vmatpush1.bf16.msra.mxu0 0
    %1836 = vmatprep.subr.bf16.mxu0 0
    %1837 = vmatpush1.bf16.msra.mxu0 0
    %1838 = vmatprep.subr.bf16.mxu0 %v364
    %1839 = vmatpush1.bf16.msra.mxu0 %v363
    %1840 = vmatprep.subr.bf16.mxu0 0
    %1841 = vmatpush2.bf16.msra.mxu0 0
    %1842 = vmatprep.subr.bf16.mxu0 0
    %1843 = vmatpush2.bf16.msra.mxu0 0
    %1844 = vmatprep.subr.bf16.mxu0 0
    %1845 = vmatpush2.bf16.msra.mxu0 0
    %1846 = vmatprep.subr.bf16.mxu0 0
    %1847 = vmatpush2.bf16.msra.mxu0 0
    %1848 = vmatprep.subr.bf16.mxu0 0
    %1849 = vmatpush2.bf16.msra.mxu0 0
    %1850 = vmatprep.subr.bf16.mxu0 0
    %1851 = vmatpush2.bf16.msra.mxu0 0
    %1852 = vmatprep.subr.bf16.mxu0 0
    %1853 = vmatpush2.bf16.msra.mxu0 0
    %1854 = vmatprep.subr.bf16.mxu0 0
    %1855 = vmatpush2.bf16.msra.mxu0 0
    %1856 = vmatprep.mubr.bf16.mxu0 0
    %1857 = vmatmul.mubr.bf16.gmra.mxu0 %v1822
    %v1858 = vpop.f32.mrf.mxu0
    %v1859 = vadd.f32 %v1767, %v1858
    %v1860 = vpop.f32.mrf.mxu0
    %v1861 = vadd.f32 %v1769, %v1860
    %v1862 = vpop.f32.mrf.mxu0
    %v1863 = vpop.f32.mrf.mxu0
    %1864 = vdwg.mxu0
    %1865 = vmatprep.subr.bf16.mxu0 0
    %1866 = vmatpush1.bf16.msra.mxu0 0
    %1867 = vmatprep.subr.bf16.mxu0 0
    %1868 = vmatpush1.bf16.msra.mxu0 0
    %1869 = vmatprep.subr.bf16.mxu0 0
    %1870 = vmatpush1.bf16.msra.mxu0 0
    %1871 = vmatprep.subr.bf16.mxu0 0
    %1872 = vmatpush1.bf16.msra.mxu0 0
    %1873 = vmatprep.subr.bf16.mxu0 0
    %1874 = vmatpush1.bf16.msra.mxu0 0
    %1875 = vmatprep.subr.bf16.mxu0 0
    %1876 = vmatpush1.bf16.msra.mxu0 0
    %1877 = vmatprep.subr.bf16.mxu0 0
    %1878 = vmatpush1.bf16.msra.mxu0 0
    %1879 = vmatprep.subr.bf16.mxu0 %v366
    %1880 = vmatpush1.bf16.msra.mxu0 %v365
    %1881 = vmatprep.subr.bf16.mxu0 0
    %1882 = vmatpush2.bf16.msra.mxu0 0
    %1883 = vmatprep.subr.bf16.mxu0 0
    %1884 = vmatpush2.bf16.msra.mxu0 0
    %1885 = vmatprep.subr.bf16.mxu0 0
    %1886 = vmatpush2.bf16.msra.mxu0 0
    %1887 = vmatprep.subr.bf16.mxu0 0
    %1888 = vmatpush2.bf16.msra.mxu0 0
    %1889 = vmatprep.subr.bf16.mxu0 0
    %1890 = vmatpush2.bf16.msra.mxu0 0
    %1891 = vmatprep.subr.bf16.mxu0 0
    %1892 = vmatpush2.bf16.msra.mxu0 0
    %1893 = vmatprep.subr.bf16.mxu0 0
    %1894 = vmatpush2.bf16.msra.mxu0 0
    %1895 = vmatprep.subr.bf16.mxu0 0
    %1896 = vmatpush2.bf16.msra.mxu0 0
    %1897 = vmatprep.mubr.bf16.mxu0 0
    %1898 = vmatmul.mubr.bf16.gmra.mxu0 %v1822
    %v1899 = vpop.f32.mrf.mxu0
    %v1900 = vadd.f32 %v1808, %v1899
    %v1901 = vpop.f32.mrf.mxu0
    %v1902 = vadd.f32 %v1810, %v1901
    %v1903 = vpop.f32.mrf.mxu0
    %v1904 = vpop.f32.mrf.mxu0
    %1905 = vdwg.mxu0
    %v1906 = vadd.f32 %v1859, %v48
    %v1907 = vadd.f32 %v1861, %v52
    %v1908 = vadd.f32 %v1900, %v56
    %v1909 = vadd.f32 %v1902, %v60
    %v1910 = vxor.u32 %v1906, 2147483648
    %v1911 = vmul.f32 %v1910, 1.442695
    %v1912 = vpow.pop %v1911
    %v1913 = vadd.f32 %v1912, 1.0
    %v1914 = vrcp.pop %v1913
    %v1915 = vmul.f32 1.0, %v1914
    %v1916 = vxor.u32 %v1907, 2147483648
    %v1917 = vmul.f32 %v1916, 1.442695
    %v1918 = vpow.pop %v1917
    %v1919 = vadd.f32 %v1918, 1.0
    %v1920 = vrcp.pop %v1919
    %v1921 = vmul.f32 1.0, %v1920
    %v1922 = vtanh.pop %v1908
    %v1923 = vxor.u32 %v1909, 2147483648
    %v1924 = vmul.f32 %v1923, 1.442695
    %v1925 = vpow.pop %v1924
    %v1926 = vadd.f32 %v1925, 1.0
    %v1927 = vrcp.pop %v1926
    %v1928 = vmul.f32 1.0, %v1927
    %v1929 = vmul.f32 %v1921, %v1724
    %v1930 = vmul.f32 %v1915, %v1922
    %v1931 = vadd.f32 %v1929, %v1930
    %v1932 = vtanh.pop %v1931
    %v1933 = vmul.f32 %v1928, %v1932
    %v1934 = vld [vmem:[%s4] sm:$0xff]
    %v1935 = vld [vmem:[%s4 + $0x8] sm:$0xff]
    %v1936 = vld [vmem:[%s4 + $0x10] sm:$0xff]
    %v1937 = vld [vmem:[%s4 + $0x18] sm:$0xff]
    %v1938 = vld [vmem:[%s4 + $0x20] sm:$0xff]
    %v1939 = vld [vmem:[%s4 + $0x28] sm:$0xff]
    %v1940 = vld [vmem:[%s4 + $0x30] sm:$0xff]
    %v1941 = vld [vmem:[%s4 + $0x38] sm:$0xff]
    %v1942 = vld [vmem:[%s4 + $0x40] sm:$0xff]
    %v1943 = vld [vmem:[%s4 + $0x48] sm:$0xff]
    %v1944 = vld [vmem:[%s4 + $0x50] sm:$0xff]
    %v1945 = vld [vmem:[%s4 + $0x58] sm:$0xff]
    %v1946 = vld [vmem:[%s4 + $0x60] sm:$0xff]
    %v1947 = vld [vmem:[%s4 + $0x68] sm:$0xff]
    %v1948 = vld [vmem:[%s4 + $0x70] sm:$0xff]
    %v1949 = vld [vmem:[%s4 + $0x78] sm:$0xff]
    %v1950 = vld [vmem:[%s5] sm:$0x1]
    %v1952 = vlaneseq
    %v1953 = vshrl.u32 %v1952, 7
    %v1954 = vsub.s32 0, %v1953
    %v1955 = vrot.slane %v1950, %v1954
    %1957 = vmatprep.subr.mxu0 0.0
    %1958 = vmatpush1.msra.mxu0 %v1949
    %1959 = vmatprep.subr.mxu0 0.0
    %1960 = vmatpush1.msra.mxu0 %v1948
    %1961 = vmatprep.subr.mxu0 0.0
    %1962 = vmatpush1.msra.mxu0 %v1947
    %1963 = vmatprep.subr.mxu0 0.0
    %1964 = vmatpush1.msra.mxu0 %v1946
    %1965 = vmatprep.subr.mxu0 0.0
    %1966 = vmatpush1.msra.mxu0 %v1945
    %1967 = vmatprep.subr.mxu0 0.0
    %1968 = vmatpush1.msra.mxu0 %v1944
    %1969 = vmatprep.subr.mxu0 0.0
    %1970 = vmatpush1.msra.mxu0 %v1943
    %1971 = vmatprep.subr.mxu0 0.0
    %1972 = vmatpush1.msra.mxu0 %v1942
    %1973 = vmatprep.subr.mxu0 0.0
    %1974 = vmatpush1.msra.mxu0 %v1941
    %1975 = vmatprep.subr.mxu0 0.0
    %1976 = vmatpush1.msra.mxu0 %v1940
    %1977 = vmatprep.subr.mxu0 0.0
    %1978 = vmatpush1.msra.mxu0 %v1939
    %1979 = vmatprep.subr.mxu0 0.0
    %1980 = vmatpush1.msra.mxu0 %v1938
    %1981 = vmatprep.subr.mxu0 0.0
    %1982 = vmatpush1.msra.mxu0 %v1937
    %1983 = vmatprep.subr.mxu0 0.0
    %1984 = vmatpush1.msra.mxu0 %v1936
    %1985 = vmatprep.subr.mxu0 0.0
    %1986 = vmatpush1.msra.mxu0 %v1935
    %1987 = vmatprep.subr.mxu0 0.0
    %1988 = vmatpush1.msra.mxu0 %v1934
    %1989 = vmatprep.subr.mxu0 0.0
    %1990 = vmatpush2.msra.mxu0 0.0
    %1991 = vmatprep.subr.mxu0 0.0
    %1992 = vmatpush2.msra.mxu0 0.0
    %1993 = vmatprep.subr.mxu0 0.0
    %1994 = vmatpush2.msra.mxu0 0.0
    %1995 = vmatprep.subr.mxu0 0.0
    %1996 = vmatpush2.msra.mxu0 0.0
    %1997 = vmatprep.subr.mxu0 0.0
    %1998 = vmatpush2.msra.mxu0 0.0
    %1999 = vmatprep.subr.mxu0 0.0
    %2000 = vmatpush2.msra.mxu0 0.0
    %2001 = vmatprep.subr.mxu0 0.0
    %2002 = vmatpush2.msra.mxu0 0.0
    %2003 = vmatprep.subr.mxu0 0.0
    %2004 = vmatpush2.msra.mxu0 0.0
    %2005 = vmatprep.subr.mxu0 0.0
    %2006 = vmatpush2.msra.mxu0 0.0
    %2007 = vmatprep.subr.mxu0 0.0
    %2008 = vmatpush2.msra.mxu0 0.0
    %2009 = vmatprep.subr.mxu0 0.0
    %2010 = vmatpush2.msra.mxu0 0.0
    %2011 = vmatprep.subr.mxu0 0.0
    %2012 = vmatpush2.msra.mxu0 0.0
    %2013 = vmatprep.subr.mxu0 0.0
    %2014 = vmatpush2.msra.mxu0 0.0
    %2015 = vmatprep.subr.mxu0 0.0
    %2016 = vmatpush2.msra.mxu0 0.0
    %2017 = vmatprep.subr.mxu0 0.0
    %2018 = vmatpush2.msra.mxu0 0.0
    %2019 = vmatprep.subr.mxu0 0.0
    %2020 = vmatpush2.msra.mxu0 0.0
    %2021 = vmatprep.mubr.f32.mxu0 0.0
    %2022 = vmatmul.mubr.f32.gmra.mxu0 %v1933
    %v2023 = vpop.f32.mrf.mxu0
    %v2024 = vadd.f32 %v1955, %v2023
    %v2025 = vpop.f32.mrf.mxu0
    %2026 = vdwg.mxu0
    %vm2027 = vcmp.gt.f32.partialorder %v2024, 0.0
    %v2028 = vmul.f32 %v2024, 0.01
    %v2029 = vsel %vm2027, %v2024, %v2028
    %vm2030 = vcmask 25600
    %2031 = vst.msk [vmem:[#allocation5] sm:$0x3] %vm2030, %v2029
    // Predicated region
    $region30: #{dqn_lstm_forward.1} parent=1 // pred_check
      _
    $region31: #{dqn_lstm_forward.1} parent=1 // pred_check_branch
      %2033 = sbr.rel (0) target = $region33
    $region32: #{dqn_lstm_forward.1} parent=1 // pred_region
      %s2035 = ssub.s32 32, 32
      %2036 = vsyncadd [#allocation4], %s2035
      %s2038 = sshll.u32 [#allocation5], 4
      %s2039 = int_to_ptr.vmem [resolvable:$true] %s2038
      %2041 = dma.vmem_to_hbm [thread:$0]  %s2039, 32, %s6, [#allocation4]
    $region33: #{dqn_lstm_forward.1} parent=1 // pred_fallthru
      _
    // Predicated region
    $region34: #{dqn_lstm_forward.1} parent=1 // pred_check
      _
    $region35: #{dqn_lstm_forward.1} parent=1 // pred_check_branch
      %2043 = sbr.rel (0) target = $region37
    $region36: #{dqn_lstm_forward.1} parent=1 // pred_region
      %2044 = dma.done [#allocation4], 32
    $region37: #{dqn_lstm_forward.1} parent=1 // pred_fallthru
      _
    %2045 = vsyncpa [#allocation3], 1
    %2046 = vsyncpa [#allocation4], 1

</llo_original>
